<compile_context>
chip_gen: v7x
topology: tpu7x:2x2x1
jax: 0.10.0
libtpu: 0.0.40
codegen_flags: <defaults>
</compile_context>

<pallas_src>
import jax
import jax.numpy as jnp
from jax.experimental import pallas as pl
from jax.experimental.pallas import tpu as pltpu

LAYERS = 3
LANE = 128                    # TPU lane width (last-dim tiling granule)
MAX_TILE_B = 1024             # amortizes the ~0.35 us per-grid-step overhead
VMEM_TILE_BUDGET = 40 << 20   # per-step VMEM target; safe inside v7x's 64 MiB


def _ceil_to(x, mult):
    return ((x + mult - 1) // mult) * mult


def _soft_threshold(x, th):
    # self_active(x, th) = relu(x - th) - relu(-x - th) == x - clip(x, -th, th)
    # (identical for th >= 0, which holds for the module's active_para params).
    return x - jnp.clip(x, -th, th)


def _plan_tiling(m, d, B, layers, weight_elt_bytes):
    """Pick a lane-dense batch tile from an explicit VMEM budget.

    Returns (tile_b, padded_B, vmem_limit_bytes)."""
    b_lane = _ceil_to(B, LANE)
    # f32 bytes per batch column resident in VMEM:
    #   double-buffered input tiles (X, Z0, E0, L0) and output tiles (Z, E, L, T)
    io_cols = (d + 3 * m) + layers * (d + 2 * m) + (layers + 1) * m
    per_col = 2 * 4 * io_cols + 4 * (d + 4 * m)      # + headroom for spilled temps
    weight_vmem = 2 * 2 * m * d * weight_elt_bytes   # A and W, double-buffered
    budget = max(VMEM_TILE_BUDGET - weight_vmem, per_col * LANE)
    tile_b = (budget // per_col) // LANE * LANE
    tile_b = int(max(LANE, min(MAX_TILE_B, tile_b, b_lane)))
    # v7x megacore: keep >= 2 grid steps on the "parallel" batch axis whenever
    # the batch allows it, so both TensorCores get work (no effect on v5e/v6e).
    if b_lane >= 2 * LANE:
        tile_b = min(tile_b, max(LANE, (b_lane // 2) // LANE * LANE))
    b_pad = _ceil_to(b_lane, tile_b)
    footprint = per_col * tile_b + weight_vmem
    vmem_limit = int(min(60 << 20, max(footprint + (4 << 20), 32 << 20)))
    return tile_b, b_pad, vmem_limit


def _dladmm_kernel(beta1_ref, beta2_ref, beta3_ref, ss1_ref, ss2_ref,
                   ap_ref, ap1_ref,
                   A_ref, W_ref, X_ref, Z0_ref, E0_ref, L0_ref,
                   Z_out, E_out, L_out, T_out):
    # A/W arrive already in MXU precision (bf16 or f32) from the wrapper.
    A = A_ref[...]          # (m, d)
    W = W_ref[...]          # (d, m)
    X = X_ref[...]          # (m, tb) f32
    Z = Z0_ref[...]         # (d, tb) f32
    E = E0_ref[...]         # (m, tb) f32
    L = L0_ref[...]         # (m, tb) f32

    mxu_dtype = A.dtype
    out_dt = Z_out.dtype
    layers = Z_out.shape[0]

    def mm(lhs, rhs):
        # MXU matmul: operands in mxu_dtype, f32 accumulation.
        return jnp.dot(lhs, rhs.astype(mxu_dtype),
                       preferred_element_type=jnp.float32)

    # T0 = A @ Z0 + E0 - X
    T = mm(A, Z) + E - X
    T_out[0] = T.astype(out_dt)

    # Static unroll over the small, fixed layer count.
    for k in range(layers):
        b1 = beta1_ref[k]
        b2 = beta2_ref[k]
        b3 = beta3_ref[k]
        s1 = ss1_ref[k]
        s2 = ss2_ref[k]
        ap = ap_ref[k]
        ap1 = ap1_ref[k]

        # Var = L + beta1 * T
        Var = L + b1 * T
        # Z <- soft(Z - ss1 * W @ Var, active_para)   (fc(Var.t()).t() == W @ Var)
        Z = _soft_threshold(Z - s1 * mm(W, Var), ap)
        # VVar = L + beta2 * (A @ Z + E - X)
        AZ = mm(A, Z)
        VVar = L + b2 * (AZ + E - X)
        # E <- soft(E - ss2 * VVar, active_para1)
        E = _soft_threshold(E - s2 * VVar, ap1)
        # T <- A @ Z + E - X ;  L <- L + beta3 * T
        T = AZ + E - X
        L = L + b3 * T

        Z_out[k] = Z.astype(out_dt)
        E_out[k] = E.astype(out_dt)
        L_out[k] = L.astype(out_dt)
        T_out[k + 1] = T.astype(out_dt)


def dladmm_forward(scalars, A, W, X, Z0, E0, L0, *,
                   use_bf16=True, out_dtype=jnp.float32, trim_output=True):
    """Full unrolled DLADMM forward in one Pallas call.

    scalars: dict of per-layer scalar params, each shape (layers,) float32.
    Returns stacked (Z, E, L, T) arrays of shapes
      (layers, d, B), (layers, m, B), (layers, m, B), (layers+1, m, B)
    (columns padded to the batch tile if trim_output=False).
    """
    layers = scalars["beta1"].shape[0]
    m, d = A.shape
    B = X.shape[1]

    weight_elt = 2 if use_bf16 else 4
    tile_b, B_pad, vmem_limit = _plan_tiling(m, d, B, layers, weight_elt)
    num_tiles = B_pad // tile_b

    # Feed A/W at MXU precision from the wrapper: halves the replicated-weight
    # HBM->VMEM DMA and removes the per-grid-step VPU cast inside the kernel.
    # (bf16 MXU is native on v5e/v6e/v7x; elementwise math stays f32.)
    A_in = A.astype(jnp.bfloat16) if use_bf16 else A
    W_in = W.astype(jnp.bfloat16) if use_bf16 else W

    def pad_cols(x):
        if x.shape[1] == B_pad:
            return x
        return jnp.pad(x, ((0, 0), (0, B_pad - x.shape[1])))

    Xp = pad_cols(X)
    Z0p = pad_cols(Z0)
    E0p = pad_cols(E0)
    L0p = pad_cols(L0)

    # index_maps receive (grid_i, *scalar_prefetch_refs); prefetch refs unused.
    rep = lambda i, *_: (0, 0)       # A, W replicated across batch tiles
    col = lambda i, *_: (0, i)       # per-batch-tile 2-D arrays
    col3 = lambda i, *_: (0, 0, i)   # per-batch-tile stacked outputs

    out_shapes = (
        jax.ShapeDtypeStruct((layers, d, B_pad), out_dtype),      # Z
        jax.ShapeDtypeStruct((layers, m, B_pad), out_dtype),      # E
        jax.ShapeDtypeStruct((layers, m, B_pad), out_dtype),      # L
        jax.ShapeDtypeStruct((layers + 1, m, B_pad), out_dtype),  # T
    )

    grid_spec = pltpu.PrefetchScalarGridSpec(
        num_scalar_prefetch=7,
        grid=(num_tiles,),
        in_specs=[
            pl.BlockSpec((m, d), rep),        # A (constant block index ->
            pl.BlockSpec((d, m), rep),        # W  no re-DMA across tiles)
            pl.BlockSpec((m, tile_b), col),   # X
            pl.BlockSpec((d, tile_b), col),   # Z0
            pl.BlockSpec((m, tile_b), col),   # E0
            pl.BlockSpec((m, tile_b), col),   # L0
        ],
        out_specs=(
            pl.BlockSpec((layers, d, tile_b), col3),
            pl.BlockSpec((layers, m, tile_b), col3),
            pl.BlockSpec((layers, m, tile_b), col3),
            pl.BlockSpec((layers + 1, m, tile_b), col3),
        ),
    )

    Z_out, E_out, L_out, T_out = pl.pallas_call(
        _dladmm_kernel,
        out_shape=out_shapes,
        grid_spec=grid_spec,
        compiler_params=pltpu.CompilerParams(
            dimension_semantics=("parallel",),
            vmem_limit_bytes=vmem_limit),
    )(scalars["beta1"], scalars["beta2"], scalars["beta3"],
      scalars["ss1"], scalars["ss2"],
      scalars["active_para"], scalars["active_para1"],
      A_in, W_in, Xp, Z0p, E0p, L0p)

    outs = (Z_out, E_out, L_out, T_out)
    # Skip the trim (an extra HBM copy of all outputs) whenever possible.
    if trim_output and B_pad != B:
        outs = tuple(o[..., :B] for o in outs)
    return outs


def dladmm_forward_ref(scalars, A, W, X, Z0, E0, L0):
    """Pure-JAX f32 reference mirroring the PyTorch forward exactly."""
    layers = scalars["beta1"].shape[0]
    Z, E, L = Z0, E0, L0
    T = A @ Z + E - X
    Zs, Es, Ls, Ts = [], [], [], [T]
    for k in range(layers):
        b1 = scalars["beta1"][k]
        b2 = scalars["beta2"][k]
        b3 = scalars["beta3"][k]
        s1 = scalars["ss1"][k]
        s2 = scalars["ss2"][k]
        ap = scalars["active_para"][k]
        ap1 = scalars["active_para1"][k]
        Var = L + b1 * T
        pre = Z - s1 * (W @ Var)
        Z = jnp.maximum(pre - ap, 0.0) - jnp.maximum(-pre - ap, 0.0)
        AZ = A @ Z
        VVar = L + b2 * (AZ + E - X)
        pre_e = E - s2 * VVar
        E = jnp.maximum(pre_e - ap1, 0.0) - jnp.maximum(-pre_e - ap1, 0.0)
        T = AZ + E - X
        L = L + b3 * T
        Zs.append(Z); Es.append(E); Ls.append(L); Ts.append(T)
    return (jnp.stack(Zs), jnp.stack(Es), jnp.stack(Ls), jnp.stack(Ts))


if __name__ == "__main__":
    # Small shapes consistent with the module: m observed dim, d code dim,
    # B batch (columns). n is unused in forward.
    m, d, B = 32, 64, 16
    layers = LAYERS

    key = jax.random.PRNGKey(0)
    kA, kW, kX, kZ, kE, kL = jax.random.split(key, 6)

    # Deterministic parameter init (mirrors __init__):
    A = jax.random.normal(kA, (m, d), dtype=jnp.float32) / jnp.sqrt(jnp.float32(m))
    # fc.weight = (A.t() + 0.001 * randn) * 0.4   (tied across layers)
    W = (A.T + 0.001 * jax.random.normal(kW, (d, m), dtype=jnp.float32)) * 0.4

    scalars = {
        "beta1": jnp.ones((layers,), jnp.float32),
        "beta2": jnp.ones((layers,), jnp.float32),
        "beta3": jnp.ones((layers,), jnp.float32),
        "ss1": jnp.ones((layers,), jnp.float32),
        "ss2": jnp.ones((layers,), jnp.float32),
        "active_para": 0.0001 * jnp.ones((layers,), jnp.float32),
        "active_para1": 0.01 * jnp.ones((layers,), jnp.float32),
    }

    # Inputs / initial iterates (Z0, E0, L0 are fixed buffers in the module).
    X = jax.random.normal(kX, (m, B), dtype=jnp.float32)
    Z0 = 0.1 * jax.random.normal(kZ, (d, B), dtype=jnp.float32)
    E0 = 0.1 * jax.random.normal(kE, (m, B), dtype=jnp.float32)
    L0 = 0.1 * jax.random.normal(kL, (m, B), dtype=jnp.float32)

    Zr, Er, Lr, Tr = dladmm_forward_ref(scalars, A, W, X, Z0, E0, L0)

    # Exact-precision path (f32 MXU) — tight tolerance vs. reference.
    out_f32 = dladmm_forward(scalars, A, W, X, Z0, E0, L0, use_bf16=False)
    jax.block_until_ready(out_f32)
    for got, want in zip(out_f32, (Zr, Er, Lr, Tr)):
        assert got.shape == want.shape
        assert jnp.allclose(got, want, atol=1e-4, rtol=1e-4)

    # Default fast path: bf16 A/W on the MXU (all TPU generations), f32 state.
    out_bf16 = dladmm_forward(scalars, A, W, X, Z0, E0, L0, use_bf16=True)
    jax.block_until_ready(out_bf16)
    for got, want in zip(out_bf16, (Zr, Er, Lr, Tr)):
        assert got.shape == want.shape
        assert jnp.allclose(got, want, atol=1e-1, rtol=1e-1)

    print("KERNEL_OK")
</pallas_src>

<mosaic_0001>
module attributes {stable_mosaic.version = 11 : i64} {
  func.func @_dladmm_kernel(%arg0: i32, %arg1: memref<3xf32, #tpu.memory_space<smem>>, %arg2: memref<3xf32, #tpu.memory_space<smem>>, %arg3: memref<3xf32, #tpu.memory_space<smem>>, %arg4: memref<3xf32, #tpu.memory_space<smem>>, %arg5: memref<3xf32, #tpu.memory_space<smem>>, %arg6: memref<3xf32, #tpu.memory_space<smem>>, %arg7: memref<3xf32, #tpu.memory_space<smem>>, %arg8: memref<32x64xf32, #tpu.memory_space<vmem>>, %arg9: memref<64x32xf32, #tpu.memory_space<vmem>>, %arg10: memref<32x128xf32, #tpu.memory_space<vmem>>, %arg11: memref<64x128xf32, #tpu.memory_space<vmem>>, %arg12: memref<32x128xf32, #tpu.memory_space<vmem>>, %arg13: memref<32x128xf32, #tpu.memory_space<vmem>>, %arg14: memref<3x64x128xf32, #tpu.memory_space<vmem>>, %arg15: memref<3x32x128xf32, #tpu.memory_space<vmem>>, %arg16: memref<3x32x128xf32, #tpu.memory_space<vmem>>, %arg17: memref<4x32x128xf32, #tpu.memory_space<vmem>>) attributes {dimension_semantics = [#tpu.dimension_semantics<parallel>], iteration_bounds = array<i64: 1>, scalar_prefetch = 7 : i64, scratch_operands = 0 : i64, tpu.core_type = #tpu.core_type<tc>, window_params = [{pipeline_mode = #tpu.pipeline_mode<synchronous>, transform_indices = @transform_0, window_bounds = array<i64: 32, 64>}, {pipeline_mode = #tpu.pipeline_mode<synchronous>, transform_indices = @transform_1, window_bounds = array<i64: 64, 32>}, {transform_indices = @transform_2, window_bounds = array<i64: 32, 128>}, {transform_indices = @transform_3, window_bounds = array<i64: 64, 128>}, {transform_indices = @transform_4, window_bounds = array<i64: 32, 128>}, {transform_indices = @transform_5, window_bounds = array<i64: 32, 128>}, {transform_indices = @transform_6, window_bounds = array<i64: 3, 64, 128>}, {transform_indices = @transform_7, window_bounds = array<i64: 3, 32, 128>}, {transform_indices = @transform_8, window_bounds = array<i64: 3, 32, 128>}, {transform_indices = @transform_9, window_bounds = array<i64: 4, 32, 128>}]} {
    %c0 = arith.constant 0 : index
    %c0_0 = arith.constant 0 : index
    %0 = vector.load %arg8[%c0, %c0_0] : memref<32x64xf32, #tpu.memory_space<vmem>>, vector<32x64xf32>
    %c0_1 = arith.constant 0 : index
    %c0_2 = arith.constant 0 : index
    %1 = vector.load %arg9[%c0_1, %c0_2] : memref<64x32xf32, #tpu.memory_space<vmem>>, vector<64x32xf32>
    %c0_3 = arith.constant 0 : index
    %c0_4 = arith.constant 0 : index
    %2 = vector.load %arg10[%c0_3, %c0_4] : memref<32x128xf32, #tpu.memory_space<vmem>>, vector<32x128xf32>
    %c0_5 = arith.constant 0 : index
    %c0_6 = arith.constant 0 : index
    %3 = vector.load %arg11[%c0_5, %c0_6] : memref<64x128xf32, #tpu.memory_space<vmem>>, vector<64x128xf32>
    %c0_7 = arith.constant 0 : index
    %c0_8 = arith.constant 0 : index
    %4 = vector.load %arg12[%c0_7, %c0_8] : memref<32x128xf32, #tpu.memory_space<vmem>>, vector<32x128xf32>
    %c0_9 = arith.constant 0 : index
    %c0_10 = arith.constant 0 : index
    %5 = vector.load %arg13[%c0_9, %c0_10] : memref<32x128xf32, #tpu.memory_space<vmem>>, vector<32x128xf32>
    %cst = arith.constant dense<0.000000e+00> : vector<32x128xf32>
    %6 = tpu.matmul %0, %3, %cst {dimension_numbers = #tpu.dot_dimension_numbers<[1], [0], [0], [1], [0, 0, 1, 1], [], []>} : vector<32x64xf32>, vector<64x128xf32>, vector<32x128xf32> -> vector<32x128xf32>
    %7 = arith.addf %6, %4 : vector<32x128xf32>
    %8 = arith.subf %7, %2 : vector<32x128xf32>
    %c0_11 = arith.constant 0 : index
    %c0_12 = arith.constant 0 : index
    %c0_13 = arith.constant 0 : index
    %9 = vector.load %arg17[%c0_11, %c0_12, %c0_13] : memref<4x32x128xf32, #tpu.memory_space<vmem>>, vector<1x32x128xf32>
    %10 = vector.shape_cast %9 : vector<1x32x128xf32> to vector<32x128xf32>
    %11 = vector.shape_cast %8 : vector<32x128xf32> to vector<1x32x128xf32>
    tpu.vector_store %arg17[%c0_11, %c0_12, %c0_13], %11 {strides = array<i32>} : memref<4x32x128xf32, #tpu.memory_space<vmem>>, vector<1x32x128xf32>,
    %c0_14 = arith.constant 0 : index
    %12 = memref.load %arg1[%c0_14] : memref<3xf32, #tpu.memory_space<smem>>
    %c0_15 = arith.constant 0 : index
    %13 = memref.load %arg2[%c0_15] : memref<3xf32, #tpu.memory_space<smem>>
    %c0_16 = arith.constant 0 : index
    %14 = memref.load %arg3[%c0_16] : memref<3xf32, #tpu.memory_space<smem>>
    %c0_17 = arith.constant 0 : index
    %15 = memref.load %arg4[%c0_17] : memref<3xf32, #tpu.memory_space<smem>>
    %c0_18 = arith.constant 0 : index
    %16 = memref.load %arg5[%c0_18] : memref<3xf32, #tpu.memory_space<smem>>
    %c0_19 = arith.constant 0 : index
    %17 = memref.load %arg6[%c0_19] : memref<3xf32, #tpu.memory_space<smem>>
    %c0_20 = arith.constant 0 : index
    %18 = memref.load %arg7[%c0_20] : memref<3xf32, #tpu.memory_space<smem>>
    %19 = vector.broadcast %12 : f32 to vector<32x128xf32>
    %20 = arith.mulf %19, %8 : vector<32x128xf32>
    %21 = arith.addf %5, %20 : vector<32x128xf32>
    %cst_21 = arith.constant dense<0.000000e+00> : vector<64x128xf32>
    %22 = tpu.matmul %1, %21, %cst_21 {dimension_numbers = #tpu.dot_dimension_numbers<[1], [0], [0], [1], [0, 0, 1, 1], [], []>} : vector<64x32xf32>, vector<32x128xf32>, vector<64x128xf32> -> vector<64x128xf32>
    %23 = vector.broadcast %15 : f32 to vector<64x128xf32>
    %24 = arith.mulf %23, %22 : vector<64x128xf32>
    %25 = arith.subf %3, %24 : vector<64x128xf32>
    %cst_22 = arith.constant 0.000000e+00 : f32
    %26 = arith.subf %cst_22, %17 : f32
    %27 = vector.broadcast %26 : f32 to vector<64x128xf32>
    %28 = arith.maximumf %27, %25 : vector<64x128xf32>
    %29 = vector.broadcast %17 : f32 to vector<64x128xf32>
    %30 = arith.minimumf %29, %28 : vector<64x128xf32>
    %31 = arith.subf %25, %30 : vector<64x128xf32>
    %cst_23 = arith.constant dense<0.000000e+00> : vector<32x128xf32>
    %32 = tpu.matmul %0, %31, %cst_23 {dimension_numbers = #tpu.dot_dimension_numbers<[1], [0], [0], [1], [0, 0, 1, 1], [], []>} : vector<32x64xf32>, vector<64x128xf32>, vector<32x128xf32> -> vector<32x128xf32>
    %33 = arith.addf %32, %4 : vector<32x128xf32>
    %34 = arith.subf %33, %2 : vector<32x128xf32>
    %35 = vector.broadcast %13 : f32 to vector<32x128xf32>
    %36 = arith.mulf %35, %34 : vector<32x128xf32>
    %37 = arith.addf %5, %36 : vector<32x128xf32>
    %38 = vector.broadcast %16 : f32 to vector<32x128xf32>
    %39 = arith.mulf %38, %37 : vector<32x128xf32>
    %40 = arith.subf %4, %39 : vector<32x128xf32>
    %cst_24 = arith.constant 0.000000e+00 : f32
    %41 = arith.subf %cst_24, %18 : f32
    %42 = vector.broadcast %41 : f32 to vector<32x128xf32>
    %43 = arith.maximumf %42, %40 : vector<32x128xf32>
    %44 = vector.broadcast %18 : f32 to vector<32x128xf32>
    %45 = arith.minimumf %44, %43 : vector<32x128xf32>
    %46 = arith.subf %40, %45 : vector<32x128xf32>
    %47 = arith.addf %32, %46 : vector<32x128xf32>
    %48 = arith.subf %47, %2 : vector<32x128xf32>
    %49 = vector.broadcast %14 : f32 to vector<32x128xf32>
    %50 = arith.mulf %49, %48 : vector<32x128xf32>
    %51 = arith.addf %5, %50 : vector<32x128xf32>
    %c0_25 = arith.constant 0 : index
    %c0_26 = arith.constant 0 : index
    %c0_27 = arith.constant 0 : index
    %52 = vector.load %arg14[%c0_25, %c0_26, %c0_27] : memref<3x64x128xf32, #tpu.memory_space<vmem>>, vector<1x64x128xf32>
    %53 = vector.shape_cast %52 : vector<1x64x128xf32> to vector<64x128xf32>
    %54 = vector.shape_cast %31 : vector<64x128xf32> to vector<1x64x128xf32>
    tpu.vector_store %arg14[%c0_25, %c0_26, %c0_27], %54 {strides = array<i32>} : memref<3x64x128xf32, #tpu.memory_space<vmem>>, vector<1x64x128xf32>,
    %c0_28 = arith.constant 0 : index
    %c0_29 = arith.constant 0 : index
    %c0_30 = arith.constant 0 : index
    %55 = vector.load %arg15[%c0_28, %c0_29, %c0_30] : memref<3x32x128xf32, #tpu.memory_space<vmem>>, vector<1x32x128xf32>
    %56 = vector.shape_cast %55 : vector<1x32x128xf32> to vector<32x128xf32>
    %57 = vector.shape_cast %46 : vector<32x128xf32> to vector<1x32x128xf32>
    tpu.vector_store %arg15[%c0_28, %c0_29, %c0_30], %57 {strides = array<i32>} : memref<3x32x128xf32, #tpu.memory_space<vmem>>, vector<1x32x128xf32>,
    %c0_31 = arith.constant 0 : index
    %c0_32 = arith.constant 0 : index
    %c0_33 = arith.constant 0 : index
    %58 = vector.load %arg16[%c0_31, %c0_32, %c0_33] : memref<3x32x128xf32, #tpu.memory_space<vmem>>, vector<1x32x128xf32>
    %59 = vector.shape_cast %58 : vector<1x32x128xf32> to vector<32x128xf32>
    %60 = vector.shape_cast %51 : vector<32x128xf32> to vector<1x32x128xf32>
    tpu.vector_store %arg16[%c0_31, %c0_32, %c0_33], %60 {strides = array<i32>} : memref<3x32x128xf32, #tpu.memory_space<vmem>>, vector<1x32x128xf32>,
    %c1 = arith.constant 1 : index
    %c0_34 = arith.constant 0 : index
    %c0_35 = arith.constant 0 : index
    %61 = vector.load %arg17[%c1, %c0_34, %c0_35] : memref<4x32x128xf32, #tpu.memory_space<vmem>>, vector<1x32x128xf32>
    %62 = vector.shape_cast %61 : vector<1x32x128xf32> to vector<32x128xf32>
    %63 = vector.shape_cast %48 : vector<32x128xf32> to vector<1x32x128xf32>
    tpu.vector_store %arg17[%c1, %c0_34, %c0_35], %63 {strides = array<i32>} : memref<4x32x128xf32, #tpu.memory_space<vmem>>, vector<1x32x128xf32>,
    %c1_36 = arith.constant 1 : index
    %64 = memref.load %arg1[%c1_36] : memref<3xf32, #tpu.memory_space<smem>>
    %c1_37 = arith.constant 1 : index
    %65 = memref.load %arg2[%c1_37] : memref<3xf32, #tpu.memory_space<smem>>
    %c1_38 = arith.constant 1 : index
    %66 = memref.load %arg3[%c1_38] : memref<3xf32, #tpu.memory_space<smem>>
    %c1_39 = arith.constant 1 : index
    %67 = memref.load %arg4[%c1_39] : memref<3xf32, #tpu.memory_space<smem>>
    %c1_40 = arith.constant 1 : index
    %68 = memref.load %arg5[%c1_40] : memref<3xf32, #tpu.memory_space<smem>>
    %c1_41 = arith.constant 1 : index
    %69 = memref.load %arg6[%c1_41] : memref<3xf32, #tpu.memory_space<smem>>
    %c1_42 = arith.constant 1 : index
    %70 = memref.load %arg7[%c1_42] : memref<3xf32, #tpu.memory_space<smem>>
    %71 = vector.broadcast %64 : f32 to vector<32x128xf32>
    %72 = arith.mulf %71, %48 : vector<32x128xf32>
    %73 = arith.addf %51, %72 : vector<32x128xf32>
    %cst_43 = arith.constant dense<0.000000e+00> : vector<64x128xf32>
    %74 = tpu.matmul %1, %73, %cst_43 {dimension_numbers = #tpu.dot_dimension_numbers<[1], [0], [0], [1], [0, 0, 1, 1], [], []>} : vector<64x32xf32>, vector<32x128xf32>, vector<64x128xf32> -> vector<64x128xf32>
    %75 = vector.broadcast %67 : f32 to vector<64x128xf32>
    %76 = arith.mulf %75, %74 : vector<64x128xf32>
    %77 = arith.subf %31, %76 : vector<64x128xf32>
    %cst_44 = arith.constant 0.000000e+00 : f32
    %78 = arith.subf %cst_44, %69 : f32
    %79 = vector.broadcast %78 : f32 to vector<64x128xf32>
    %80 = arith.maximumf %79, %77 : vector<64x128xf32>
    %81 = vector.broadcast %69 : f32 to vector<64x128xf32>
    %82 = arith.minimumf %81, %80 : vector<64x128xf32>
    %83 = arith.subf %77, %82 : vector<64x128xf32>
    %cst_45 = arith.constant dense<0.000000e+00> : vector<32x128xf32>
    %84 = tpu.matmul %0, %83, %cst_45 {dimension_numbers = #tpu.dot_dimension_numbers<[1], [0], [0], [1], [0, 0, 1, 1], [], []>} : vector<32x64xf32>, vector<64x128xf32>, vector<32x128xf32> -> vector<32x128xf32>
    %85 = arith.addf %84, %46 : vector<32x128xf32>
    %86 = arith.subf %85, %2 : vector<32x128xf32>
    %87 = vector.broadcast %65 : f32 to vector<32x128xf32>
    %88 = arith.mulf %87, %86 : vector<32x128xf32>
    %89 = arith.addf %51, %88 : vector<32x128xf32>
    %90 = vector.broadcast %68 : f32 to vector<32x128xf32>
    %91 = arith.mulf %90, %89 : vector<32x128xf32>
    %92 = arith.subf %46, %91 : vector<32x128xf32>
    %cst_46 = arith.constant 0.000000e+00 : f32
    %93 = arith.subf %cst_46, %70 : f32
    %94 = vector.broadcast %93 : f32 to vector<32x128xf32>
    %95 = arith.maximumf %94, %92 : vector<32x128xf32>
    %96 = vector.broadcast %70 : f32 to vector<32x128xf32>
    %97 = arith.minimumf %96, %95 : vector<32x128xf32>
    %98 = arith.subf %92, %97 : vector<32x128xf32>
    %99 = arith.addf %84, %98 : vector<32x128xf32>
    %100 = arith.subf %99, %2 : vector<32x128xf32>
    %101 = vector.broadcast %66 : f32 to vector<32x128xf32>
    %102 = arith.mulf %101, %100 : vector<32x128xf32>
    %103 = arith.addf %51, %102 : vector<32x128xf32>
    %c1_47 = arith.constant 1 : index
    %c0_48 = arith.constant 0 : index
    %c0_49 = arith.constant 0 : index
    %104 = vector.load %arg14[%c1_47, %c0_48, %c0_49] : memref<3x64x128xf32, #tpu.memory_space<vmem>>, vector<1x64x128xf32>
    %105 = vector.shape_cast %104 : vector<1x64x128xf32> to vector<64x128xf32>
    %106 = vector.shape_cast %83 : vector<64x128xf32> to vector<1x64x128xf32>
    tpu.vector_store %arg14[%c1_47, %c0_48, %c0_49], %106 {strides = array<i32>} : memref<3x64x128xf32, #tpu.memory_space<vmem>>, vector<1x64x128xf32>,
    %c1_50 = arith.constant 1 : index
    %c0_51 = arith.constant 0 : index
    %c0_52 = arith.constant 0 : index
    %107 = vector.load %arg15[%c1_50, %c0_51, %c0_52] : memref<3x32x128xf32, #tpu.memory_space<vmem>>, vector<1x32x128xf32>
    %108 = vector.shape_cast %107 : vector<1x32x128xf32> to vector<32x128xf32>
    %109 = vector.shape_cast %98 : vector<32x128xf32> to vector<1x32x128xf32>
    tpu.vector_store %arg15[%c1_50, %c0_51, %c0_52], %109 {strides = array<i32>} : memref<3x32x128xf32, #tpu.memory_space<vmem>>, vector<1x32x128xf32>,
    %c1_53 = arith.constant 1 : index
    %c0_54 = arith.constant 0 : index
    %c0_55 = arith.constant 0 : index
    %110 = vector.load %arg16[%c1_53, %c0_54, %c0_55] : memref<3x32x128xf32, #tpu.memory_space<vmem>>, vector<1x32x128xf32>
    %111 = vector.shape_cast %110 : vector<1x32x128xf32> to vector<32x128xf32>
    %112 = vector.shape_cast %103 : vector<32x128xf32> to vector<1x32x128xf32>
    tpu.vector_store %arg16[%c1_53, %c0_54, %c0_55], %112 {strides = array<i32>} : memref<3x32x128xf32, #tpu.memory_space<vmem>>, vector<1x32x128xf32>,
    %c2 = arith.constant 2 : index
    %c0_56 = arith.constant 0 : index
    %c0_57 = arith.constant 0 : index
    %113 = vector.load %arg17[%c2, %c0_56, %c0_57] : memref<4x32x128xf32, #tpu.memory_space<vmem>>, vector<1x32x128xf32>
    %114 = vector.shape_cast %113 : vector<1x32x128xf32> to vector<32x128xf32>
    %115 = vector.shape_cast %100 : vector<32x128xf32> to vector<1x32x128xf32>
    tpu.vector_store %arg17[%c2, %c0_56, %c0_57], %115 {strides = array<i32>} : memref<4x32x128xf32, #tpu.memory_space<vmem>>, vector<1x32x128xf32>,
    %c2_58 = arith.constant 2 : index
    %116 = memref.load %arg1[%c2_58] : memref<3xf32, #tpu.memory_space<smem>>
    %c2_59 = arith.constant 2 : index
    %117 = memref.load %arg2[%c2_59] : memref<3xf32, #tpu.memory_space<smem>>
    %c2_60 = arith.constant 2 : index
    %118 = memref.load %arg3[%c2_60] : memref<3xf32, #tpu.memory_space<smem>>
    %c2_61 = arith.constant 2 : index
    %119 = memref.load %arg4[%c2_61] : memref<3xf32, #tpu.memory_space<smem>>
    %c2_62 = arith.constant 2 : index
    %120 = memref.load %arg5[%c2_62] : memref<3xf32, #tpu.memory_space<smem>>
    %c2_63 = arith.constant 2 : index
    %121 = memref.load %arg6[%c2_63] : memref<3xf32, #tpu.memory_space<smem>>
    %c2_64 = arith.constant 2 : index
    %122 = memref.load %arg7[%c2_64] : memref<3xf32, #tpu.memory_space<smem>>
    %123 = vector.broadcast %116 : f32 to vector<32x128xf32>
    %124 = arith.mulf %123, %100 : vector<32x128xf32>
    %125 = arith.addf %103, %124 : vector<32x128xf32>
    %cst_65 = arith.constant dense<0.000000e+00> : vector<64x128xf32>
    %126 = tpu.matmul %1, %125, %cst_65 {dimension_numbers = #tpu.dot_dimension_numbers<[1], [0], [0], [1], [0, 0, 1, 1], [], []>} : vector<64x32xf32>, vector<32x128xf32>, vector<64x128xf32> -> vector<64x128xf32>
    %127 = vector.broadcast %119 : f32 to vector<64x128xf32>
    %128 = arith.mulf %127, %126 : vector<64x128xf32>
    %129 = arith.subf %83, %128 : vector<64x128xf32>
    %cst_66 = arith.constant 0.000000e+00 : f32
    %130 = arith.subf %cst_66, %121 : f32
    %131 = vector.broadcast %130 : f32 to vector<64x128xf32>
    %132 = arith.maximumf %131, %129 : vector<64x128xf32>
    %133 = vector.broadcast %121 : f32 to vector<64x128xf32>
    %134 = arith.minimumf %133, %132 : vector<64x128xf32>
    %135 = arith.subf %129, %134 : vector<64x128xf32>
    %cst_67 = arith.constant dense<0.000000e+00> : vector<32x128xf32>
    %136 = tpu.matmul %0, %135, %cst_67 {dimension_numbers = #tpu.dot_dimension_numbers<[1], [0], [0], [1], [0, 0, 1, 1], [], []>} : vector<32x64xf32>, vector<64x128xf32>, vector<32x128xf32> -> vector<32x128xf32>
    %137 = arith.addf %136, %98 : vector<32x128xf32>
    %138 = arith.subf %137, %2 : vector<32x128xf32>
    %139 = vector.broadcast %117 : f32 to vector<32x128xf32>
    %140 = arith.mulf %139, %138 : vector<32x128xf32>
    %141 = arith.addf %103, %140 : vector<32x128xf32>
    %142 = vector.broadcast %120 : f32 to vector<32x128xf32>
    %143 = arith.mulf %142, %141 : vector<32x128xf32>
    %144 = arith.subf %98, %143 : vector<32x128xf32>
    %cst_68 = arith.constant 0.000000e+00 : f32
    %145 = arith.subf %cst_68, %122 : f32
    %146 = vector.broadcast %145 : f32 to vector<32x128xf32>
    %147 = arith.maximumf %146, %144 : vector<32x128xf32>
    %148 = vector.broadcast %122 : f32 to vector<32x128xf32>
    %149 = arith.minimumf %148, %147 : vector<32x128xf32>
    %150 = arith.subf %144, %149 : vector<32x128xf32>
    %151 = arith.addf %136, %150 : vector<32x128xf32>
    %152 = arith.subf %151, %2 : vector<32x128xf32>
    %153 = vector.broadcast %118 : f32 to vector<32x128xf32>
    %154 = arith.mulf %153, %152 : vector<32x128xf32>
    %155 = arith.addf %103, %154 : vector<32x128xf32>
    %c2_69 = arith.constant 2 : index
    %c0_70 = arith.constant 0 : index
    %c0_71 = arith.constant 0 : index
    %156 = vector.load %arg14[%c2_69, %c0_70, %c0_71] : memref<3x64x128xf32, #tpu.memory_space<vmem>>, vector<1x64x128xf32>
    %157 = vector.shape_cast %156 : vector<1x64x128xf32> to vector<64x128xf32>
    %158 = vector.shape_cast %135 : vector<64x128xf32> to vector<1x64x128xf32>
    tpu.vector_store %arg14[%c2_69, %c0_70, %c0_71], %158 {strides = array<i32>} : memref<3x64x128xf32, #tpu.memory_space<vmem>>, vector<1x64x128xf32>,
    %c2_72 = arith.constant 2 : index
    %c0_73 = arith.constant 0 : index
    %c0_74 = arith.constant 0 : index
    %159 = vector.load %arg15[%c2_72, %c0_73, %c0_74] : memref<3x32x128xf32, #tpu.memory_space<vmem>>, vector<1x32x128xf32>
    %160 = vector.shape_cast %159 : vector<1x32x128xf32> to vector<32x128xf32>
    %161 = vector.shape_cast %150 : vector<32x128xf32> to vector<1x32x128xf32>
    tpu.vector_store %arg15[%c2_72, %c0_73, %c0_74], %161 {strides = array<i32>} : memref<3x32x128xf32, #tpu.memory_space<vmem>>, vector<1x32x128xf32>,
    %c2_75 = arith.constant 2 : index
    %c0_76 = arith.constant 0 : index
    %c0_77 = arith.constant 0 : index
    %162 = vector.load %arg16[%c2_75, %c0_76, %c0_77] : memref<3x32x128xf32, #tpu.memory_space<vmem>>, vector<1x32x128xf32>
    %163 = vector.shape_cast %162 : vector<1x32x128xf32> to vector<32x128xf32>
    %164 = vector.shape_cast %155 : vector<32x128xf32> to vector<1x32x128xf32>
    tpu.vector_store %arg16[%c2_75, %c0_76, %c0_77], %164 {strides = array<i32>} : memref<3x32x128xf32, #tpu.memory_space<vmem>>, vector<1x32x128xf32>,
    %c3 = arith.constant 3 : index
    %c0_78 = arith.constant 0 : index
    %c0_79 = arith.constant 0 : index
    %165 = vector.load %arg17[%c3, %c0_78, %c0_79] : memref<4x32x128xf32, #tpu.memory_space<vmem>>, vector<1x32x128xf32>
    %166 = vector.shape_cast %165 : vector<1x32x128xf32> to vector<32x128xf32>
    %167 = vector.shape_cast %152 : vector<32x128xf32> to vector<1x32x128xf32>
    tpu.vector_store %arg17[%c3, %c0_78, %c0_79], %167 {strides = array<i32>} : memref<4x32x128xf32, #tpu.memory_space<vmem>>, vector<1x32x128xf32>,
    return
  }
  func.func @transform_0(%arg0: i32, %arg1: memref<3xf32, #tpu.memory_space<smem>>, %arg2: memref<3xf32, #tpu.memory_space<smem>>, %arg3: memref<3xf32, #tpu.memory_space<smem>>, %arg4: memref<3xf32, #tpu.memory_space<smem>>, %arg5: memref<3xf32, #tpu.memory_space<smem>>, %arg6: memref<3xf32, #tpu.memory_space<smem>>, %arg7: memref<3xf32, #tpu.memory_space<smem>>) -> (i32, i32) {
    %c0_i32 = arith.constant 0 : i32
    %c0_i32_0 = arith.constant 0 : i32
    %c0_i32_1 = arith.constant 0 : i32
    return %c0_i32, %c0_i32_0 : i32, i32
  }
  func.func @transform_1(%arg0: i32, %arg1: memref<3xf32, #tpu.memory_space<smem>>, %arg2: memref<3xf32, #tpu.memory_space<smem>>, %arg3: memref<3xf32, #tpu.memory_space<smem>>, %arg4: memref<3xf32, #tpu.memory_space<smem>>, %arg5: memref<3xf32, #tpu.memory_space<smem>>, %arg6: memref<3xf32, #tpu.memory_space<smem>>, %arg7: memref<3xf32, #tpu.memory_space<smem>>) -> (i32, i32) {
    %c0_i32 = arith.constant 0 : i32
    %c0_i32_0 = arith.constant 0 : i32
    %c0_i32_1 = arith.constant 0 : i32
    return %c0_i32, %c0_i32_0 : i32, i32
  }
  func.func @transform_2(%arg0: i32, %arg1: memref<3xf32, #tpu.memory_space<smem>>, %arg2: memref<3xf32, #tpu.memory_space<smem>>, %arg3: memref<3xf32, #tpu.memory_space<smem>>, %arg4: memref<3xf32, #tpu.memory_space<smem>>, %arg5: memref<3xf32, #tpu.memory_space<smem>>, %arg6: memref<3xf32, #tpu.memory_space<smem>>, %arg7: memref<3xf32, #tpu.memory_space<smem>>) -> (i32, i32) {
    %c0_i32 = arith.constant 0 : i32
    %c0_i32_0 = arith.constant 0 : i32
    return %c0_i32, %arg0 : i32, i32
  }
  func.func @transform_3(%arg0: i32, %arg1: memref<3xf32, #tpu.memory_space<smem>>, %arg2: memref<3xf32, #tpu.memory_space<smem>>, %arg3: memref<3xf32, #tpu.memory_space<smem>>, %arg4: memref<3xf32, #tpu.memory_space<smem>>, %arg5: memref<3xf32, #tpu.memory_space<smem>>, %arg6: memref<3xf32, #tpu.memory_space<smem>>, %arg7: memref<3xf32, #tpu.memory_space<smem>>) -> (i32, i32) {
    %c0_i32 = arith.constant 0 : i32
    %c0_i32_0 = arith.constant 0 : i32
    return %c0_i32, %arg0 : i32, i32
  }
  func.func @transform_4(%arg0: i32, %arg1: memref<3xf32, #tpu.memory_space<smem>>, %arg2: memref<3xf32, #tpu.memory_space<smem>>, %arg3: memref<3xf32, #tpu.memory_space<smem>>, %arg4: memref<3xf32, #tpu.memory_space<smem>>, %arg5: memref<3xf32, #tpu.memory_space<smem>>, %arg6: memref<3xf32, #tpu.memory_space<smem>>, %arg7: memref<3xf32, #tpu.memory_space<smem>>) -> (i32, i32) {
    %c0_i32 = arith.constant 0 : i32
    %c0_i32_0 = arith.constant 0 : i32
    return %c0_i32, %arg0 : i32, i32
  }
  func.func @transform_5(%arg0: i32, %arg1: memref<3xf32, #tpu.memory_space<smem>>, %arg2: memref<3xf32, #tpu.memory_space<smem>>, %arg3: memref<3xf32, #tpu.memory_space<smem>>, %arg4: memref<3xf32, #tpu.memory_space<smem>>, %arg5: memref<3xf32, #tpu.memory_space<smem>>, %arg6: memref<3xf32, #tpu.memory_space<smem>>, %arg7: memref<3xf32, #tpu.memory_space<smem>>) -> (i32, i32) {
    %c0_i32 = arith.constant 0 : i32
    %c0_i32_0 = arith.constant 0 : i32
    return %c0_i32, %arg0 : i32, i32
  }
  func.func @transform_6(%arg0: i32, %arg1: memref<3xf32, #tpu.memory_space<smem>>, %arg2: memref<3xf32, #tpu.memory_space<smem>>, %arg3: memref<3xf32, #tpu.memory_space<smem>>, %arg4: memref<3xf32, #tpu.memory_space<smem>>, %arg5: memref<3xf32, #tpu.memory_space<smem>>, %arg6: memref<3xf32, #tpu.memory_space<smem>>, %arg7: memref<3xf32, #tpu.memory_space<smem>>) -> (i32, i32, i32) {
    %c0_i32 = arith.constant 0 : i32
    %c0_i32_0 = arith.constant 0 : i32
    %c0_i32_1 = arith.constant 0 : i32
    return %c0_i32, %c0_i32_0, %arg0 : i32, i32, i32
  }
  func.func @transform_7(%arg0: i32, %arg1: memref<3xf32, #tpu.memory_space<smem>>, %arg2: memref<3xf32, #tpu.memory_space<smem>>, %arg3: memref<3xf32, #tpu.memory_space<smem>>, %arg4: memref<3xf32, #tpu.memory_space<smem>>, %arg5: memref<3xf32, #tpu.memory_space<smem>>, %arg6: memref<3xf32, #tpu.memory_space<smem>>, %arg7: memref<3xf32, #tpu.memory_space<smem>>) -> (i32, i32, i32) {
    %c0_i32 = arith.constant 0 : i32
    %c0_i32_0 = arith.constant 0 : i32
    %c0_i32_1 = arith.constant 0 : i32
    return %c0_i32, %c0_i32_0, %arg0 : i32, i32, i32
  }
  func.func @transform_8(%arg0: i32, %arg1: memref<3xf32, #tpu.memory_space<smem>>, %arg2: memref<3xf32, #tpu.memory_space<smem>>, %arg3: memref<3xf32, #tpu.memory_space<smem>>, %arg4: memref<3xf32, #tpu.memory_space<smem>>, %arg5: memref<3xf32, #tpu.memory_space<smem>>, %arg6: memref<3xf32, #tpu.memory_space<smem>>, %arg7: memref<3xf32, #tpu.memory_space<smem>>) -> (i32, i32, i32) {
    %c0_i32 = arith.constant 0 : i32
    %c0_i32_0 = arith.constant 0 : i32
    %c0_i32_1 = arith.constant 0 : i32
    return %c0_i32, %c0_i32_0, %arg0 : i32, i32, i32
  }
  func.func @transform_9(%arg0: i32, %arg1: memref<3xf32, #tpu.memory_space<smem>>, %arg2: memref<3xf32, #tpu.memory_space<smem>>, %arg3: memref<3xf32, #tpu.memory_space<smem>>, %arg4: memref<3xf32, #tpu.memory_space<smem>>, %arg5: memref<3xf32, #tpu.memory_space<smem>>, %arg6: memref<3xf32, #tpu.memory_space<smem>>, %arg7: memref<3xf32, #tpu.memory_space<smem>>) -> (i32, i32, i32) {
    %c0_i32 = arith.constant 0 : i32
    %c0_i32_0 = arith.constant 0 : i32
    %c0_i32_1 = arith.constant 0 : i32
    return %c0_i32, %c0_i32_0, %arg0 : i32, i32, i32
  }
}

</mosaic_0001>

<llo_original>
// kernel: tpu_custom_call.1
$region0: #{tpu_custom_call.1}
  #allocation0 [shape = 'u32[]', space=smem, size = 0x4, offset = 0x4, fixed_abs, tag = 'smem constant byte address 0x4 - core index']
  #allocation1 [shape = 'u32[144,128]{1,0:T(1,128)}', space=vmem, size = 0x12000, scoped, tag = 'internal scratch']
  #allocation2 [shape = 's32[1]{0}', space=sflag, size = 0x4, scoped, tag = 'scoped memory for tpu_custom_call.1']
  #allocation3 [shape = 'u8[512]{0}', space=smem, size = 0x200, scoped, tag = 'prefetched SMEM operand 0']
  #allocation4 [shape = 'u8[512]{0}', space=smem, size = 0x200, scoped, tag = 'prefetched SMEM operand 1']
  #allocation5 [shape = 'u8[512]{0}', space=smem, size = 0x200, scoped, tag = 'prefetched SMEM operand 2']
  #allocation6 [shape = 'u8[512]{0}', space=smem, size = 0x200, scoped, tag = 'prefetched SMEM operand 3']
  #allocation7 [shape = 'u8[512]{0}', space=smem, size = 0x200, scoped, tag = 'prefetched SMEM operand 4']
  #allocation8 [shape = 'u8[512]{0}', space=smem, size = 0x200, scoped, tag = 'prefetched SMEM operand 5']
  #allocation9 [shape = 'u8[512]{0}', space=smem, size = 0x200, scoped, tag = 'prefetched SMEM operand 6']
  %s0 = inlined_call_operand.vmem [shape: f32[3], index: 0, kind: input, shape index: {}]
  %s1 = inlined_call_operand.vmem [shape: f32[3], index: 1, kind: input, shape index: {}]
  %s2 = inlined_call_operand.hbm [shape: f32[3], index: 2, kind: input, shape index: {}]
  %s3 = inlined_call_operand.hbm [shape: f32[3], index: 3, kind: input, shape index: {}]
  %s4 = inlined_call_operand.hbm [shape: f32[3], index: 4, kind: input, shape index: {}]
  %s5 = inlined_call_operand.hbm [shape: f32[3], index: 5, kind: input, shape index: {}]
  %s6 = inlined_call_operand.hbm [shape: f32[3], index: 6, kind: input, shape index: {}]
  %s7 = inlined_call_operand.vmem [shape: f32[32,64], index: 7, kind: input, shape index: {}]
  %s8 = inlined_call_operand.vmem [shape: f32[64,32], index: 8, kind: input, shape index: {}]
  %s9 = inlined_call_operand.vmem [shape: f32[32,128], index: 9, kind: input, shape index: {}]
  %s10 = inlined_call_operand.vmem [shape: f32[64,128], index: 10, kind: input, shape index: {}]
  %s11 = inlined_call_operand.hbm [shape: f32[32,128], index: 11, kind: input, shape index: {}]
  %s12 = inlined_call_operand.hbm [shape: f32[32,128], index: 12, kind: input, shape index: {}]
  %s13 = inlined_call_operand.hbm [shape: f32[3,64,128], index: 13, kind: output, shape index: {0}]
  %s14 = inlined_call_operand.hbm [shape: f32[3,32,128], index: 14, kind: output, shape index: {1}]
  %s15 = inlined_call_operand.hbm [shape: f32[3,32,128], index: 15, kind: output, shape index: {2}]
  %s16 = inlined_call_operand.hbm [shape: f32[4,32,128], index: 16, kind: output, shape index: {3}]
  %17 = xla_tuple %s13, %s14, %s15, %s16
  %s18 = sld [smem:[#allocation0]]
  $region66: #{tpu_custom_call.1} parent=0
    _
  %s20 = ssub.s32 1, %s18
  %s21 = scalar_select 0, %s20, %s18
  %s22 = sshll.u32 %s0, 4
  %s23 = int_to_ptr.vmem [resolvable:$true] %s22
  %25 = dma.vmem_to_smem %s23, 16, [#allocation3], [#allocation2]
  %s26 = sshll.u32 %s1, 4
  %s27 = int_to_ptr.vmem [resolvable:$true] %s26
  %29 = dma.vmem_to_smem %s27, 16, [#allocation4], [#allocation2]
  %31 = dma.hbm_to_smem %s2, 16, [#allocation5], [#allocation2]
  %33 = dma.hbm_to_smem %s3, 16, [#allocation6], [#allocation2]
  %35 = dma.hbm_to_smem %s4, 16, [#allocation7], [#allocation2]
  %37 = dma.hbm_to_smem %s5, 16, [#allocation8], [#allocation2]
  %39 = dma.hbm_to_smem %s6, 16, [#allocation9], [#allocation2]
  %40 = dma.done [#allocation2], 112
  %41 = sfence
  $region1: #{tpu_custom_call.1} parent=0
    #allocation10 [shape = 'u8[16384]{0}', space=vmem, size = 0x4000, scoped, tag = 'input window, operand 11, single buffered']
    #allocation11 [shape = 's32[1]{0}', space=sflag, size = 0x4, scoped, tag = 'scoped memory for tpu_custom_call.1']
    #allocation12 [shape = 's32[1]{0}', space=sflag, size = 0x4, scoped, tag = 'scoped memory for tpu_custom_call.1']
    #allocation13 [shape = 'u8[16384]{0}', space=vmem, size = 0x4000, scoped, tag = 'input window, operand 12, single buffered']
    #allocation14 [shape = 's32[1]{0}', space=sflag, size = 0x4, scoped, tag = 'scoped memory for tpu_custom_call.1']
    #allocation15 [shape = 'u8[98304]{0}', space=vmem, size = 0x18000, scoped, tag = 'output window, operand 0, single buffered']
    #allocation16 [shape = 'u8[49152]{0}', space=vmem, size = 0xc000, scoped, tag = 'output window, operand 1, single buffered']
    #allocation17 [shape = 's32[1]{0}', space=sflag, size = 0x4, scoped, tag = 'scoped memory for tpu_custom_call.1']
    #allocation18 [shape = 'u8[49152]{0}', space=vmem, size = 0xc000, scoped, tag = 'output window, operand 2, single buffered']
    #allocation19 [shape = 'u8[65536]{0}', space=vmem, size = 0x10000, scoped, tag = 'output window, operand 3, single buffered']
    #allocation20 [shape = 's32[1]{0}', space=sflag, size = 0x4, scoped, tag = 'scoped memory for tpu_custom_call.1']
    %42 = vsyncpa [#allocation11], 0
    %43 = vsyncpa [#allocation14], 0
    %44 = vsyncpa [#allocation12], 0
    %45 = vsyncpa [#allocation17], 0
    %46 = vsyncpa [#allocation20], 0
    // Predicated region
    $region2: #{tpu_custom_call.1} parent=1 // pred_check
      _
    $region3: #{tpu_custom_call.1} parent=1 // pred_check_branch
      %48 = sbr.rel (0) target = $region5
    $region4: #{tpu_custom_call.1} parent=1 // pred_region
      _
    $region5: #{tpu_custom_call.1} parent=1 // pred_fallthru
      _
    // Predicated region
    $region6: #{tpu_custom_call.1} parent=1 // pred_check
      _
    $region7: #{tpu_custom_call.1} parent=1 // pred_check_branch
      %50 = sbr.rel (0) target = $region9
    $region8: #{tpu_custom_call.1} parent=1 // pred_region
      _
    $region9: #{tpu_custom_call.1} parent=1 // pred_fallthru
      _
    // Predicated region
    $region10: #{tpu_custom_call.1} parent=1 // pred_check
      _
    $region11: #{tpu_custom_call.1} parent=1 // pred_check_branch
      %52 = sbr.rel (0) target = $region13
    $region12: #{tpu_custom_call.1} parent=1 // pred_region
      _
    $region13: #{tpu_custom_call.1} parent=1 // pred_fallthru
      _
    // Predicated region
    $region14: #{tpu_custom_call.1} parent=1 // pred_check
      _
    $region15: #{tpu_custom_call.1} parent=1 // pred_check_branch
      %54 = sbr.rel (0) target = $region17
    $region16: #{tpu_custom_call.1} parent=1 // pred_region
      _
    $region17: #{tpu_custom_call.1} parent=1 // pred_fallthru
      _
    // Predicated region
    $region18: #{tpu_custom_call.1} parent=1 // pred_check
      _
    $region19: #{tpu_custom_call.1} parent=1 // pred_check_branch
      %56 = sbr.rel (0) target = $region21
    $region20: #{tpu_custom_call.1} parent=1 // pred_region
      %s58 = ssub.s32 512, 512
      %59 = vsyncadd [#allocation11], %s58
      %s60 = sshll.u32 [#allocation10], 4
      %s61 = int_to_ptr.vmem [resolvable:$true] %s60
      %66 = dma.hbm_to_vmem [thread:$0]  %s11, 512, %s61, [#allocation11], 128, 128, 8
    $region21: #{tpu_custom_call.1} parent=1 // pred_fallthru
      _
    // Predicated region
    $region22: #{tpu_custom_call.1} parent=1 // pred_check
      _
    $region23: #{tpu_custom_call.1} parent=1 // pred_check_branch
      %68 = sbr.rel (0) target = $region25
    $region24: #{tpu_custom_call.1} parent=1 // pred_region
      %s70 = ssub.s32 512, 512
      %71 = vsyncadd [#allocation14], %s70
      %s72 = sshll.u32 [#allocation13], 4
      %s73 = int_to_ptr.vmem [resolvable:$true] %s72
      %78 = dma.hbm_to_vmem [thread:$0]  %s12, 512, %s73, [#allocation14], 128, 128, 8
    $region25: #{tpu_custom_call.1} parent=1 // pred_fallthru
      _
    // Predicated region
    $region26: #{tpu_custom_call.1} parent=1 // pred_check
      _
    $region27: #{tpu_custom_call.1} parent=1 // pred_check_branch
      %80 = sbr.rel (0) target = $region29
    $region28: #{tpu_custom_call.1} parent=1 // pred_region
      %81 = dma.done [#allocation11], 512
    $region29: #{tpu_custom_call.1} parent=1 // pred_fallthru
      _
    // Predicated region
    $region30: #{tpu_custom_call.1} parent=1 // pred_check
      _
    $region31: #{tpu_custom_call.1} parent=1 // pred_check_branch
      %83 = sbr.rel (0) target = $region33
    $region32: #{tpu_custom_call.1} parent=1 // pred_region
      %84 = dma.done [#allocation14], 512
    $region33: #{tpu_custom_call.1} parent=1 // pred_fallthru
      _
    %v85 = vld [vmem:[%s7] sm:$0xff]
    %v86 = vld [vmem:[%s7 + $0x8] sm:$0xff]
    %v87 = vld [vmem:[%s7 + $0x10] sm:$0xff]
    %v88 = vld [vmem:[%s7 + $0x18] sm:$0xff]
    %v89 = vld [vmem:[%s8] sm:$0xff]
    %v90 = vld [vmem:[%s8 + $0x8] sm:$0xff]
    %v91 = vld [vmem:[%s8 + $0x10] sm:$0xff]
    %v92 = vld [vmem:[%s8 + $0x18] sm:$0xff]
    %v93 = vld [vmem:[%s8 + $0x20] sm:$0xff]
    %v94 = vld [vmem:[%s8 + $0x28] sm:$0xff]
    %v95 = vld [vmem:[%s8 + $0x30] sm:$0xff]
    %v96 = vld [vmem:[%s8 + $0x38] sm:$0xff]
    %v97 = vld [vmem:[%s9] sm:$0xff]
    %v98 = vld [vmem:[%s9 + $0x8] sm:$0xff]
    %v99 = vld [vmem:[%s9 + $0x10] sm:$0xff]
    %v100 = vld [vmem:[%s9 + $0x18] sm:$0xff]
    %v101 = vld [vmem:[%s10] sm:$0xff]
    %v102 = vld [vmem:[%s10 + $0x8] sm:$0xff]
    %v103 = vld [vmem:[%s10 + $0x10] sm:$0xff]
    %v104 = vld [vmem:[%s10 + $0x18] sm:$0xff]
    %v105 = vld [vmem:[%s10 + $0x20] sm:$0xff]
    %v106 = vld [vmem:[%s10 + $0x28] sm:$0xff]
    %v107 = vld [vmem:[%s10 + $0x30] sm:$0xff]
    %v108 = vld [vmem:[%s10 + $0x38] sm:$0xff]
    %v109 = vld [vmem:[#allocation10] sm:$0xff]
    %v110 = vld [vmem:[#allocation10 + $0x8] sm:$0xff]
    %v111 = vld [vmem:[#allocation10 + $0x10] sm:$0xff]
    %v112 = vld [vmem:[#allocation10 + $0x18] sm:$0xff]
    %v113 = vld [vmem:[#allocation13] sm:$0xff]
    %v114 = vld [vmem:[#allocation13 + $0x8] sm:$0xff]
    %v115 = vld [vmem:[#allocation13 + $0x10] sm:$0xff]
    %v116 = vld [vmem:[#allocation13 + $0x18] sm:$0xff]
    %vm117 = vcmask 523264
    %v119 = vsel %vm117, %v85, 0
    %v122 = vsel %vm117, %v86, 0
    %v125 = vsel %vm117, %v87, 0
    %v128 = vsel %vm117, %v88, 0
    %130 = vmatprep.subr.mxu0 0.0
    %131 = vmatpush1.msra.mxu0 %v101
    %132 = vmatprep.subr.mxu0 0.0
    %133 = vmatpush1.msra.mxu0 %v102
    %134 = vmatprep.subr.mxu0 0.0
    %135 = vmatpush1.msra.mxu0 %v103
    %136 = vmatprep.subr.mxu0 0.0
    %137 = vmatpush1.msra.mxu0 %v104
    %138 = vmatprep.subr.mxu0 0.0
    %139 = vmatpush1.msra.mxu0 %v105
    %140 = vmatprep.subr.mxu0 0.0
    %141 = vmatpush1.msra.mxu0 %v106
    %142 = vmatprep.subr.mxu0 0.0
    %143 = vmatpush1.msra.mxu0 %v107
    %144 = vmatprep.subr.mxu0 0.0
    %145 = vmatpush1.msra.mxu0 %v108
    %146 = vmatprep.subr.mxu0 0.0
    %147 = vmatpush1.msra.mxu0 0.0
    %148 = vmatprep.subr.mxu0 0.0
    %149 = vmatpush1.msra.mxu0 0.0
    %150 = vmatprep.subr.mxu0 0.0
    %151 = vmatpush1.msra.mxu0 0.0
    %152 = vmatprep.subr.mxu0 0.0
    %153 = vmatpush1.msra.mxu0 0.0
    %154 = vmatprep.subr.mxu0 0.0
    %155 = vmatpush1.msra.mxu0 0.0
    %156 = vmatprep.subr.mxu0 0.0
    %157 = vmatpush1.msra.mxu0 0.0
    %158 = vmatprep.subr.mxu0 0.0
    %159 = vmatpush1.msra.mxu0 0.0
    %160 = vmatprep.subr.mxu0 0.0
    %161 = vmatpush1.msra.mxu0 0.0
    %162 = vmatprep.subr.mxu0 0.0
    %163 = vmatpush1.msra.mxu0 0.0
    %164 = vmatprep.subr.mxu0 0.0
    %165 = vmatpush1.msra.mxu0 0.0
    %166 = vmatprep.subr.mxu0 0.0
    %167 = vmatpush1.msra.mxu0 0.0
    %168 = vmatprep.subr.mxu0 0.0
    %169 = vmatpush1.msra.mxu0 0.0
    %170 = vmatprep.subr.mxu0 0.0
    %171 = vmatpush1.msra.mxu0 0.0
    %172 = vmatprep.subr.mxu0 0.0
    %173 = vmatpush1.msra.mxu0 0.0
    %174 = vmatprep.subr.mxu0 0.0
    %175 = vmatpush1.msra.mxu0 0.0
    %176 = vmatprep.subr.mxu0 0.0
    %177 = vmatpush1.msra.mxu0 0.0
    %178 = vmatprep.subr.mxu0 0.0
    %179 = vmatpush1.msra.mxu0 0.0
    %180 = vmatprep.subr.mxu0 0.0
    %181 = vmatpush1.msra.mxu0 0.0
    %182 = vmatprep.subr.mxu0 0.0
    %183 = vmatpush1.msra.mxu0 0.0
    %184 = vmatprep.subr.mxu0 0.0
    %185 = vmatpush1.msra.mxu0 0.0
    %186 = vmatprep.subr.mxu0 0.0
    %187 = vmatpush1.msra.mxu0 0.0
    %188 = vmatprep.subr.mxu0 0.0
    %189 = vmatpush1.msra.mxu0 0.0
    %190 = vmatprep.subr.mxu0 0.0
    %191 = vmatpush1.msra.mxu0 0.0
    %192 = vmatprep.subr.mxu0 0.0
    %193 = vmatpush1.msra.mxu0 0.0
    %194 = vmatprep.mubr.f32.mxu0 0.0
    %195 = vmatmul.mubr.f32.gmra.mrb[0].mxu0 %v119
    %v196 = vpop.f32.mrb[0].mxu0
    %v197 = vadd.f32 %v109, %v196
    %v198 = vpop.f32.mrb[0].mxu0
    %199 = vmatprep.mubr.f32.mxu0 0.0
    %200 = vmatmul.mubr.f32.gmra.mrb[0].mxu0 %v122
    %v201 = vpop.f32.mrb[0].mxu0
    %v202 = vadd.f32 %v110, %v201
    %v203 = vpop.f32.mrb[0].mxu0
    %204 = vmatprep.mubr.f32.mxu0 0.0
    %205 = vmatmul.mubr.f32.gmra.mrb[0].mxu0 %v125
    %v206 = vpop.f32.mrb[0].mxu0
    %v207 = vadd.f32 %v111, %v206
    %v208 = vpop.f32.mrb[0].mxu0
    %209 = vmatprep.mubr.f32.mxu0 0.0
    %210 = vmatmul.mubr.f32.gmra.mrb[0].mxu0 %v128
    %v211 = vpop.f32.mrb[0].mxu0
    %v212 = vadd.f32 %v112, %v211
    %v213 = vpop.f32.mrb[0].mxu0
    %214 = vdwg.mxu0
    %v215 = vsub.f32 %v197, %v97
    %v216 = vsub.f32 %v202, %v98
    %v217 = vsub.f32 %v207, %v99
    %v218 = vsub.f32 %v212, %v100
    %219 = vst [vmem:[#allocation19] sm:$0xff] %v215
    %220 = vst [vmem:[#allocation19 + $0x8] sm:$0xff] %v216
    %221 = vst [vmem:[#allocation19 + $0x10] sm:$0xff] %v217
    %222 = vst [vmem:[#allocation19 + $0x18] sm:$0xff] %v218
    %s223 = sld [smem:[#allocation3]]
    %s224 = sld [smem:[#allocation4]]
    %s225 = sld [smem:[#allocation5]]
    %s226 = sld [smem:[#allocation6]]
    %s227 = sld [smem:[#allocation7]]
    %s228 = sld [smem:[#allocation8]]
    %s229 = sld [smem:[#allocation9]]
    %v230 = vstv %s223
    %v231 = vmul.f32 %v230, %v215
    %v232 = vmul.f32 %v230, %v216
    %v233 = vmul.f32 %v230, %v217
    %v234 = vmul.f32 %v230, %v218
    %v235 = vadd.f32 %v113, %v231
    %v236 = vadd.f32 %v114, %v232
    %v237 = vadd.f32 %v115, %v233
    %v238 = vadd.f32 %v116, %v234
    %vm239 = vcmask 261120
    %v241 = vsel %vm239, %v89, 0
    %v244 = vsel %vm239, %v90, 0
    %v247 = vsel %vm239, %v91, 0
    %v250 = vsel %vm239, %v92, 0
    %v253 = vsel %vm239, %v93, 0
    %v256 = vsel %vm239, %v94, 0
    %v259 = vsel %vm239, %v95, 0
    %v262 = vsel %vm239, %v96, 0
    %264 = vmatprep.subr.mxu0 0.0
    %265 = vmatpush1.msra.mxu0 %v235
    %266 = vmatprep.subr.mxu0 0.0
    %267 = vmatpush1.msra.mxu0 %v236
    %268 = vmatprep.subr.mxu0 0.0
    %269 = vmatpush1.msra.mxu0 %v237
    %270 = vmatprep.subr.mxu0 0.0
    %271 = vmatpush1.msra.mxu0 %v238
    %272 = vmatprep.subr.mxu0 0.0
    %273 = vmatpush1.msra.mxu0 0.0
    %274 = vmatprep.subr.mxu0 0.0
    %275 = vmatpush1.msra.mxu0 0.0
    %276 = vmatprep.subr.mxu0 0.0
    %277 = vmatpush1.msra.mxu0 0.0
    %278 = vmatprep.subr.mxu0 0.0
    %279 = vmatpush1.msra.mxu0 0.0
    %280 = vmatprep.subr.mxu0 0.0
    %281 = vmatpush1.msra.mxu0 0.0
    %282 = vmatprep.subr.mxu0 0.0
    %283 = vmatpush1.msra.mxu0 0.0
    %284 = vmatprep.subr.mxu0 0.0
    %285 = vmatpush1.msra.mxu0 0.0
    %286 = vmatprep.subr.mxu0 0.0
    %287 = vmatpush1.msra.mxu0 0.0
    %288 = vmatprep.subr.mxu0 0.0
    %289 = vmatpush1.msra.mxu0 0.0
    %290 = vmatprep.subr.mxu0 0.0
    %291 = vmatpush1.msra.mxu0 0.0
    %292 = vmatprep.subr.mxu0 0.0
    %293 = vmatpush1.msra.mxu0 0.0
    %294 = vmatprep.subr.mxu0 0.0
    %295 = vmatpush1.msra.mxu0 0.0
    %296 = vmatprep.subr.mxu0 0.0
    %297 = vmatpush1.msra.mxu0 0.0
    %298 = vmatprep.subr.mxu0 0.0
    %299 = vmatpush1.msra.mxu0 0.0
    %300 = vmatprep.subr.mxu0 0.0
    %301 = vmatpush1.msra.mxu0 0.0
    %302 = vmatprep.subr.mxu0 0.0
    %303 = vmatpush1.msra.mxu0 0.0
    %304 = vmatprep.subr.mxu0 0.0
    %305 = vmatpush1.msra.mxu0 0.0
    %306 = vmatprep.subr.mxu0 0.0
    %307 = vmatpush1.msra.mxu0 0.0
    %308 = vmatprep.subr.mxu0 0.0
    %309 = vmatpush1.msra.mxu0 0.0
    %310 = vmatprep.subr.mxu0 0.0
    %311 = vmatpush1.msra.mxu0 0.0
    %312 = vmatprep.subr.mxu0 0.0
    %313 = vmatpush1.msra.mxu0 0.0
    %314 = vmatprep.subr.mxu0 0.0
    %315 = vmatpush1.msra.mxu0 0.0
    %316 = vmatprep.subr.mxu0 0.0
    %317 = vmatpush1.msra.mxu0 0.0
    %318 = vmatprep.subr.mxu0 0.0
    %319 = vmatpush1.msra.mxu0 0.0
    %320 = vmatprep.subr.mxu0 0.0
    %321 = vmatpush1.msra.mxu0 0.0
    %322 = vmatprep.subr.mxu0 0.0
    %323 = vmatpush1.msra.mxu0 0.0
    %324 = vmatprep.subr.mxu0 0.0
    %325 = vmatpush1.msra.mxu0 0.0
    %326 = vmatprep.subr.mxu0 0.0
    %327 = vmatpush1.msra.mxu0 0.0
    %328 = vmatprep.mubr.f32.mxu0 0.0
    %329 = vmatmul.mubr.f32.gmra.mrb[0].mxu0 %v241
    %v330 = vpop.f32.mrb[0].mxu0
    %v331 = vadd.f32 0.0, %v330
    %v332 = vpop.f32.mrb[0].mxu0
    %333 = vmatprep.mubr.f32.mxu0 0.0
    %334 = vmatmul.mubr.f32.gmra.mrb[0].mxu0 %v244
    %v335 = vpop.f32.mrb[0].mxu0
    %v336 = vadd.f32 0.0, %v335
    %v337 = vpop.f32.mrb[0].mxu0
    %338 = vmatprep.mubr.f32.mxu0 0.0
    %339 = vmatmul.mubr.f32.gmra.mrb[0].mxu0 %v247
    %v340 = vpop.f32.mrb[0].mxu0
    %v341 = vadd.f32 0.0, %v340
    %v342 = vpop.f32.mrb[0].mxu0
    %343 = vmatprep.mubr.f32.mxu0 0.0
    %344 = vmatmul.mubr.f32.gmra.mrb[0].mxu0 %v250
    %v345 = vpop.f32.mrb[0].mxu0
    %v346 = vadd.f32 0.0, %v345
    %v347 = vpop.f32.mrb[0].mxu0
    %348 = vmatprep.mubr.f32.mxu0 0.0
    %349 = vmatmul.mubr.f32.gmra.mrb[0].mxu0 %v253
    %v350 = vpop.f32.mrb[0].mxu0
    %v351 = vadd.f32 0.0, %v350
    %v352 = vpop.f32.mrb[0].mxu0
    %353 = vmatprep.mubr.f32.mxu0 0.0
    %354 = vmatmul.mubr.f32.gmra.mrb[0].mxu0 %v256
    %v355 = vpop.f32.mrb[0].mxu0
    %v356 = vadd.f32 0.0, %v355
    %v357 = vpop.f32.mrb[0].mxu0
    %358 = vmatprep.mubr.f32.mxu0 0.0
    %359 = vmatmul.mubr.f32.gmra.mrb[0].mxu0 %v259
    %v360 = vpop.f32.mrb[0].mxu0
    %v361 = vadd.f32 0.0, %v360
    %v362 = vpop.f32.mrb[0].mxu0
    %363 = vmatprep.mubr.f32.mxu0 0.0
    %364 = vmatmul.mubr.f32.gmra.mrb[0].mxu0 %v262
    %v365 = vpop.f32.mrb[0].mxu0
    %v366 = vadd.f32 0.0, %v365
    %v367 = vpop.f32.mrb[0].mxu0
    %368 = vdwg.mxu0
    %v369 = vstv %s226
    %v370 = vmul.f32 %v369, %v331
    %v371 = vmul.f32 %v369, %v336
    %v372 = vmul.f32 %v369, %v341
    %v373 = vmul.f32 %v369, %v346
    %v374 = vmul.f32 %v369, %v351
    %v375 = vmul.f32 %v369, %v356
    %v376 = vmul.f32 %v369, %v361
    %v377 = vmul.f32 %v369, %v366
    %v378 = vsub.f32 %v101, %v370
    %v379 = vsub.f32 %v102, %v371
    %v380 = vsub.f32 %v103, %v372
    %v381 = vsub.f32 %v104, %v373
    %v382 = vsub.f32 %v105, %v374
    %v383 = vsub.f32 %v106, %v375
    %v384 = vsub.f32 %v107, %v376
    %v385 = vsub.f32 %v108, %v377
    %s386 = ssub.f32 0.0, %s228
    %v387 = vstv %s386
    %v388 = vmax.f32 %v387, %v378
    %v389 = vmax.f32 %v387, %v379
    %v390 = vmax.f32 %v387, %v380
    %v391 = vmax.f32 %v387, %v381
    %v392 = vmax.f32 %v387, %v382
    %v393 = vmax.f32 %v387, %v383
    %v394 = vmax.f32 %v387, %v384
    %v395 = vmax.f32 %v387, %v385
    %v396 = vstv %s228
    %v397 = vmin.f32 %v396, %v388
    %v398 = vmin.f32 %v396, %v389
    %v399 = vmin.f32 %v396, %v390
    %v400 = vmin.f32 %v396, %v391
    %v401 = vmin.f32 %v396, %v392
    %v402 = vmin.f32 %v396, %v393
    %v403 = vmin.f32 %v396, %v394
    %v404 = vmin.f32 %v396, %v395
    %v405 = vsub.f32 %v378, %v397
    %v406 = vsub.f32 %v379, %v398
    %v407 = vsub.f32 %v380, %v399
    %v408 = vsub.f32 %v381, %v400
    %v409 = vsub.f32 %v382, %v401
    %v410 = vsub.f32 %v383, %v402
    %v411 = vsub.f32 %v384, %v403
    %v412 = vsub.f32 %v385, %v404
    %413 = vmatprep.subr.mxu0 0.0
    %414 = vmatpush1.msra.mxu0 %v405
    %415 = vmatprep.subr.mxu0 0.0
    %416 = vmatpush1.msra.mxu0 %v406
    %417 = vmatprep.subr.mxu0 0.0
    %418 = vmatpush1.msra.mxu0 %v407
    %419 = vmatprep.subr.mxu0 0.0
    %420 = vmatpush1.msra.mxu0 %v408
    %421 = vmatprep.subr.mxu0 0.0
    %422 = vmatpush1.msra.mxu0 %v409
    %423 = vmatprep.subr.mxu0 0.0
    %424 = vmatpush1.msra.mxu0 %v410
    %425 = vmatprep.subr.mxu0 0.0
    %426 = vmatpush1.msra.mxu0 %v411
    %427 = vmatprep.subr.mxu0 0.0
    %428 = vmatpush1.msra.mxu0 %v412
    %429 = vmatprep.subr.mxu0 0.0
    %430 = vmatpush1.msra.mxu0 0.0
    %431 = vmatprep.subr.mxu0 0.0
    %432 = vmatpush1.msra.mxu0 0.0
    %433 = vmatprep.subr.mxu0 0.0
    %434 = vmatpush1.msra.mxu0 0.0
    %435 = vmatprep.subr.mxu0 0.0
    %436 = vmatpush1.msra.mxu0 0.0
    %437 = vmatprep.subr.mxu0 0.0
    %438 = vmatpush1.msra.mxu0 0.0
    %439 = vmatprep.subr.mxu0 0.0
    %440 = vmatpush1.msra.mxu0 0.0
    %441 = vmatprep.subr.mxu0 0.0
    %442 = vmatpush1.msra.mxu0 0.0
    %443 = vmatprep.subr.mxu0 0.0
    %444 = vmatpush1.msra.mxu0 0.0
    %445 = vmatprep.subr.mxu0 0.0
    %446 = vmatpush1.msra.mxu0 0.0
    %447 = vmatprep.subr.mxu0 0.0
    %448 = vmatpush1.msra.mxu0 0.0
    %449 = vmatprep.subr.mxu0 0.0
    %450 = vmatpush1.msra.mxu0 0.0
    %451 = vmatprep.subr.mxu0 0.0
    %452 = vmatpush1.msra.mxu0 0.0
    %453 = vmatprep.subr.mxu0 0.0
    %454 = vmatpush1.msra.mxu0 0.0
    %455 = vmatprep.subr.mxu0 0.0
    %456 = vmatpush1.msra.mxu0 0.0
    %457 = vmatprep.subr.mxu0 0.0
    %458 = vmatpush1.msra.mxu0 0.0
    %459 = vmatprep.subr.mxu0 0.0
    %460 = vmatpush1.msra.mxu0 0.0
    %461 = vmatprep.subr.mxu0 0.0
    %462 = vmatpush1.msra.mxu0 0.0
    %463 = vmatprep.subr.mxu0 0.0
    %464 = vmatpush1.msra.mxu0 0.0
    %465 = vmatprep.subr.mxu0 0.0
    %466 = vmatpush1.msra.mxu0 0.0
    %467 = vmatprep.subr.mxu0 0.0
    %468 = vmatpush1.msra.mxu0 0.0
    %469 = vmatprep.subr.mxu0 0.0
    %470 = vmatpush1.msra.mxu0 0.0
    %471 = vmatprep.subr.mxu0 0.0
    %472 = vmatpush1.msra.mxu0 0.0
    %473 = vmatprep.subr.mxu0 0.0
    %474 = vmatpush1.msra.mxu0 0.0
    %475 = vmatprep.subr.mxu0 0.0
    %476 = vmatpush1.msra.mxu0 0.0
    %477 = vmatprep.mubr.f32.mxu0 0.0
    %478 = vmatmul.mubr.f32.gmra.mrb[0].mxu0 %v119
    %v479 = vpop.f32.mrb[0].mxu0
    %v480 = vadd.f32 0.0, %v479
    %v481 = vpop.f32.mrb[0].mxu0
    %482 = vmatprep.mubr.f32.mxu0 0.0
    %483 = vmatmul.mubr.f32.gmra.mrb[0].mxu0 %v122
    %v484 = vpop.f32.mrb[0].mxu0
    %v485 = vadd.f32 0.0, %v484
    %v486 = vpop.f32.mrb[0].mxu0
    %487 = vmatprep.mubr.f32.mxu0 0.0
    %488 = vmatmul.mubr.f32.gmra.mrb[0].mxu0 %v125
    %v489 = vpop.f32.mrb[0].mxu0
    %v490 = vadd.f32 0.0, %v489
    %v491 = vpop.f32.mrb[0].mxu0
    %492 = vmatprep.mubr.f32.mxu0 0.0
    %493 = vmatmul.mubr.f32.gmra.mrb[0].mxu0 %v128
    %v494 = vpop.f32.mrb[0].mxu0
    %v495 = vadd.f32 0.0, %v494
    %v496 = vpop.f32.mrb[0].mxu0
    %497 = vdwg.mxu0
    %v498 = vadd.f32 %v480, %v109
    %v499 = vadd.f32 %v485, %v110
    %v500 = vadd.f32 %v490, %v111
    %v501 = vadd.f32 %v495, %v112
    %v502 = vsub.f32 %v498, %v97
    %v503 = vsub.f32 %v499, %v98
    %v504 = vsub.f32 %v500, %v99
    %v505 = vsub.f32 %v501, %v100
    %v506 = vstv %s224
    %v507 = vmul.f32 %v506, %v502
    %v508 = vmul.f32 %v506, %v503
    %v509 = vmul.f32 %v506, %v504
    %v510 = vmul.f32 %v506, %v505
    %v511 = vadd.f32 %v113, %v507
    %v512 = vadd.f32 %v114, %v508
    %v513 = vadd.f32 %v115, %v509
    %v514 = vadd.f32 %v116, %v510
    %v515 = vstv %s227
    %v516 = vmul.f32 %v515, %v511
    %v517 = vmul.f32 %v515, %v512
    %v518 = vmul.f32 %v515, %v513
    %v519 = vmul.f32 %v515, %v514
    %v520 = vsub.f32 %v109, %v516
    %v521 = vsub.f32 %v110, %v517
    %v522 = vsub.f32 %v111, %v518
    %v523 = vsub.f32 %v112, %v519
    %s524 = ssub.f32 0.0, %s229
    %v525 = vstv %s524
    %v526 = vmax.f32 %v525, %v520
    %v527 = vmax.f32 %v525, %v521
    %v528 = vmax.f32 %v525, %v522
    %v529 = vmax.f32 %v525, %v523
    %v530 = vstv %s229
    %v531 = vmin.f32 %v530, %v526
    %v532 = vmin.f32 %v530, %v527
    %v533 = vmin.f32 %v530, %v528
    %v534 = vmin.f32 %v530, %v529
    %v535 = vsub.f32 %v520, %v531
    %v536 = vsub.f32 %v521, %v532
    %v537 = vsub.f32 %v522, %v533
    %v538 = vsub.f32 %v523, %v534
    %v539 = vadd.f32 %v480, %v535
    %v540 = vadd.f32 %v485, %v536
    %v541 = vadd.f32 %v490, %v537
    %v542 = vadd.f32 %v495, %v538
    %v543 = vsub.f32 %v539, %v97
    %v544 = vsub.f32 %v540, %v98
    %v545 = vsub.f32 %v541, %v99
    %v546 = vsub.f32 %v542, %v100
    %v547 = vstv %s225
    %v548 = vmul.f32 %v547, %v543
    %v549 = vmul.f32 %v547, %v544
    %v550 = vmul.f32 %v547, %v545
    %v551 = vmul.f32 %v547, %v546
    %v552 = vadd.f32 %v113, %v548
    %v553 = vadd.f32 %v114, %v549
    %v554 = vadd.f32 %v115, %v550
    %v555 = vadd.f32 %v116, %v551
    %556 = vst [vmem:[#allocation15] sm:$0xff] %v405
    %557 = vst [vmem:[#allocation15 + $0x8] sm:$0xff] %v406
    %558 = vst [vmem:[#allocation15 + $0x10] sm:$0xff] %v407
    %559 = vst [vmem:[#allocation15 + $0x18] sm:$0xff] %v408
    %560 = vst [vmem:[#allocation15 + $0x20] sm:$0xff] %v409
    %561 = vst [vmem:[#allocation15 + $0x28] sm:$0xff] %v410
    %562 = vst [vmem:[#allocation15 + $0x30] sm:$0xff] %v411
    %563 = vst [vmem:[#allocation15 + $0x38] sm:$0xff] %v412
    %564 = vst [vmem:[#allocation16] sm:$0xff] %v535
    %565 = vst [vmem:[#allocation16 + $0x8] sm:$0xff] %v536
    %566 = vst [vmem:[#allocation16 + $0x10] sm:$0xff] %v537
    %567 = vst [vmem:[#allocation16 + $0x18] sm:$0xff] %v538
    %568 = vst [vmem:[#allocation18] sm:$0xff] %v552
    %569 = vst [vmem:[#allocation18 + $0x8] sm:$0xff] %v553
    %570 = vst [vmem:[#allocation18 + $0x10] sm:$0xff] %v554
    %571 = vst [vmem:[#allocation18 + $0x18] sm:$0xff] %v555
    %s572 = scalar_lea.vmem [#allocation19], 32
    %573 = vst [vmem:[%s572] sm:$0xff] %v543
    %574 = vst [vmem:[%s572 + $0x8] sm:$0xff] %v544
    %575 = vst [vmem:[%s572 + $0x10] sm:$0xff] %v545
    %576 = vst [vmem:[%s572 + $0x18] sm:$0xff] %v546
    %s577 = sld [smem:[#allocation3 + $0x1]]
    %s578 = sld [smem:[#allocation4 + $0x1]]
    %s579 = sld [smem:[#allocation5 + $0x1]]
    %s580 = sld [smem:[#allocation6 + $0x1]]
    %s581 = sld [smem:[#allocation7 + $0x1]]
    %s582 = sld [smem:[#allocation8 + $0x1]]
    %s583 = sld [smem:[#allocation9 + $0x1]]
    %v584 = vstv %s577
    %v585 = vmul.f32 %v584, %v543
    %v586 = vmul.f32 %v584, %v544
    %v587 = vmul.f32 %v584, %v545
    %v588 = vmul.f32 %v584, %v546
    %v589 = vadd.f32 %v552, %v585
    %v590 = vadd.f32 %v553, %v586
    %v591 = vadd.f32 %v554, %v587
    %v592 = vadd.f32 %v555, %v588
    %593 = vmatprep.subr.mxu0 0.0
    %594 = vmatpush1.msra.mxu0 %v589
    %595 = vmatprep.subr.mxu0 0.0
    %596 = vmatpush1.msra.mxu0 %v590
    %597 = vmatprep.subr.mxu0 0.0
    %598 = vmatpush1.msra.mxu0 %v591
    %599 = vmatprep.subr.mxu0 0.0
    %600 = vmatpush1.msra.mxu0 %v592
    %601 = vmatprep.subr.mxu0 0.0
    %602 = vmatpush1.msra.mxu0 0.0
    %603 = vmatprep.subr.mxu0 0.0
    %604 = vmatpush1.msra.mxu0 0.0
    %605 = vmatprep.subr.mxu0 0.0
    %606 = vmatpush1.msra.mxu0 0.0
    %607 = vmatprep.subr.mxu0 0.0
    %608 = vmatpush1.msra.mxu0 0.0
    %609 = vmatprep.subr.mxu0 0.0
    %610 = vmatpush1.msra.mxu0 0.0
    %611 = vmatprep.subr.mxu0 0.0
    %612 = vmatpush1.msra.mxu0 0.0
    %613 = vmatprep.subr.mxu0 0.0
    %614 = vmatpush1.msra.mxu0 0.0
    %615 = vmatprep.subr.mxu0 0.0
    %616 = vmatpush1.msra.mxu0 0.0
    %617 = vmatprep.subr.mxu0 0.0
    %618 = vmatpush1.msra.mxu0 0.0
    %619 = vmatprep.subr.mxu0 0.0
    %620 = vmatpush1.msra.mxu0 0.0
    %621 = vmatprep.subr.mxu0 0.0
    %622 = vmatpush1.msra.mxu0 0.0
    %623 = vmatprep.subr.mxu0 0.0
    %624 = vmatpush1.msra.mxu0 0.0
    %625 = vmatprep.subr.mxu0 0.0
    %626 = vmatpush1.msra.mxu0 0.0
    %627 = vmatprep.subr.mxu0 0.0
    %628 = vmatpush1.msra.mxu0 0.0
    %629 = vmatprep.subr.mxu0 0.0
    %630 = vmatpush1.msra.mxu0 0.0
    %631 = vmatprep.subr.mxu0 0.0
    %632 = vmatpush1.msra.mxu0 0.0
    %633 = vmatprep.subr.mxu0 0.0
    %634 = vmatpush1.msra.mxu0 0.0
    %635 = vmatprep.subr.mxu0 0.0
    %636 = vmatpush1.msra.mxu0 0.0
    %637 = vmatprep.subr.mxu0 0.0
    %638 = vmatpush1.msra.mxu0 0.0
    %639 = vmatprep.subr.mxu0 0.0
    %640 = vmatpush1.msra.mxu0 0.0
    %641 = vmatprep.subr.mxu0 0.0
    %642 = vmatpush1.msra.mxu0 0.0
    %643 = vmatprep.subr.mxu0 0.0
    %644 = vmatpush1.msra.mxu0 0.0
    %645 = vmatprep.subr.mxu0 0.0
    %646 = vmatpush1.msra.mxu0 0.0
    %647 = vmatprep.subr.mxu0 0.0
    %648 = vmatpush1.msra.mxu0 0.0
    %649 = vmatprep.subr.mxu0 0.0
    %650 = vmatpush1.msra.mxu0 0.0
    %651 = vmatprep.subr.mxu0 0.0
    %652 = vmatpush1.msra.mxu0 0.0
    %653 = vmatprep.subr.mxu0 0.0
    %654 = vmatpush1.msra.mxu0 0.0
    %655 = vmatprep.subr.mxu0 0.0
    %656 = vmatpush1.msra.mxu0 0.0
    %657 = vmatprep.mubr.f32.mxu0 0.0
    %658 = vmatmul.mubr.f32.gmra.mrb[0].mxu0 %v241
    %v659 = vpop.f32.mrb[0].mxu0
    %v660 = vadd.f32 0.0, %v659
    %v661 = vpop.f32.mrb[0].mxu0
    %662 = vmatprep.mubr.f32.mxu0 0.0
    %663 = vmatmul.mubr.f32.gmra.mrb[0].mxu0 %v244
    %v664 = vpop.f32.mrb[0].mxu0
    %v665 = vadd.f32 0.0, %v664
    %v666 = vpop.f32.mrb[0].mxu0
    %667 = vmatprep.mubr.f32.mxu0 0.0
    %668 = vmatmul.mubr.f32.gmra.mrb[0].mxu0 %v247
    %v669 = vpop.f32.mrb[0].mxu0
    %v670 = vadd.f32 0.0, %v669
    %v671 = vpop.f32.mrb[0].mxu0
    %672 = vmatprep.mubr.f32.mxu0 0.0
    %673 = vmatmul.mubr.f32.gmra.mrb[0].mxu0 %v250
    %v674 = vpop.f32.mrb[0].mxu0
    %v675 = vadd.f32 0.0, %v674
    %v676 = vpop.f32.mrb[0].mxu0
    %677 = vmatprep.mubr.f32.mxu0 0.0
    %678 = vmatmul.mubr.f32.gmra.mrb[0].mxu0 %v253
    %v679 = vpop.f32.mrb[0].mxu0
    %v680 = vadd.f32 0.0, %v679
    %v681 = vpop.f32.mrb[0].mxu0
    %682 = vmatprep.mubr.f32.mxu0 0.0
    %683 = vmatmul.mubr.f32.gmra.mrb[0].mxu0 %v256
    %v684 = vpop.f32.mrb[0].mxu0
    %v685 = vadd.f32 0.0, %v684
    %v686 = vpop.f32.mrb[0].mxu0
    %687 = vmatprep.mubr.f32.mxu0 0.0
    %688 = vmatmul.mubr.f32.gmra.mrb[0].mxu0 %v259
    %v689 = vpop.f32.mrb[0].mxu0
    %v690 = vadd.f32 0.0, %v689
    %v691 = vpop.f32.mrb[0].mxu0
    %692 = vmatprep.mubr.f32.mxu0 0.0
    %693 = vmatmul.mubr.f32.gmra.mrb[0].mxu0 %v262
    %v694 = vpop.f32.mrb[0].mxu0
    %v695 = vadd.f32 0.0, %v694
    %v696 = vpop.f32.mrb[0].mxu0
    %697 = vdwg.mxu0
    %v698 = vstv %s580
    %v699 = vmul.f32 %v698, %v660
    %v700 = vmul.f32 %v698, %v665
    %v701 = vmul.f32 %v698, %v670
    %v702 = vmul.f32 %v698, %v675
    %v703 = vmul.f32 %v698, %v680
    %v704 = vmul.f32 %v698, %v685
    %v705 = vmul.f32 %v698, %v690
    %v706 = vmul.f32 %v698, %v695
    %v707 = vsub.f32 %v405, %v699
    %v708 = vsub.f32 %v406, %v700
    %v709 = vsub.f32 %v407, %v701
    %v710 = vsub.f32 %v408, %v702
    %v711 = vsub.f32 %v409, %v703
    %v712 = vsub.f32 %v410, %v704
    %v713 = vsub.f32 %v411, %v705
    %v714 = vsub.f32 %v412, %v706
    %s715 = ssub.f32 0.0, %s582
    %v716 = vstv %s715
    %v717 = vmax.f32 %v716, %v707
    %v718 = vmax.f32 %v716, %v708
    %v719 = vmax.f32 %v716, %v709
    %v720 = vmax.f32 %v716, %v710
    %v721 = vmax.f32 %v716, %v711
    %v722 = vmax.f32 %v716, %v712
    %v723 = vmax.f32 %v716, %v713
    %v724 = vmax.f32 %v716, %v714
    %v725 = vstv %s582
    %v726 = vmin.f32 %v725, %v717
    %v727 = vmin.f32 %v725, %v718
    %v728 = vmin.f32 %v725, %v719
    %v729 = vmin.f32 %v725, %v720
    %v730 = vmin.f32 %v725, %v721
    %v731 = vmin.f32 %v725, %v722
    %v732 = vmin.f32 %v725, %v723
    %v733 = vmin.f32 %v725, %v724
    %v734 = vsub.f32 %v707, %v726
    %v735 = vsub.f32 %v708, %v727
    %v736 = vsub.f32 %v709, %v728
    %v737 = vsub.f32 %v710, %v729
    %v738 = vsub.f32 %v711, %v730
    %v739 = vsub.f32 %v712, %v731
    %v740 = vsub.f32 %v713, %v732
    %v741 = vsub.f32 %v714, %v733
    %742 = vmatprep.subr.mxu0 0.0
    %743 = vmatpush1.msra.mxu0 %v734
    %744 = vmatprep.subr.mxu0 0.0
    %745 = vmatpush1.msra.mxu0 %v735
    %746 = vmatprep.subr.mxu0 0.0
    %747 = vmatpush1.msra.mxu0 %v736
    %748 = vmatprep.subr.mxu0 0.0
    %749 = vmatpush1.msra.mxu0 %v737
    %750 = vmatprep.subr.mxu0 0.0
    %751 = vmatpush1.msra.mxu0 %v738
    %752 = vmatprep.subr.mxu0 0.0
    %753 = vmatpush1.msra.mxu0 %v739
    %754 = vmatprep.subr.mxu0 0.0
    %755 = vmatpush1.msra.mxu0 %v740
    %756 = vmatprep.subr.mxu0 0.0
    %757 = vmatpush1.msra.mxu0 %v741
    %758 = vmatprep.subr.mxu0 0.0
    %759 = vmatpush1.msra.mxu0 0.0
    %760 = vmatprep.subr.mxu0 0.0
    %761 = vmatpush1.msra.mxu0 0.0
    %762 = vmatprep.subr.mxu0 0.0
    %763 = vmatpush1.msra.mxu0 0.0
    %764 = vmatprep.subr.mxu0 0.0
    %765 = vmatpush1.msra.mxu0 0.0
    %766 = vmatprep.subr.mxu0 0.0
    %767 = vmatpush1.msra.mxu0 0.0
    %768 = vmatprep.subr.mxu0 0.0
    %769 = vmatpush1.msra.mxu0 0.0
    %770 = vmatprep.subr.mxu0 0.0
    %771 = vmatpush1.msra.mxu0 0.0
    %772 = vmatprep.subr.mxu0 0.0
    %773 = vmatpush1.msra.mxu0 0.0
    %774 = vmatprep.subr.mxu0 0.0
    %775 = vmatpush1.msra.mxu0 0.0
    %776 = vmatprep.subr.mxu0 0.0
    %777 = vmatpush1.msra.mxu0 0.0
    %778 = vmatprep.subr.mxu0 0.0
    %779 = vmatpush1.msra.mxu0 0.0
    %780 = vmatprep.subr.mxu0 0.0
    %781 = vmatpush1.msra.mxu0 0.0
    %782 = vmatprep.subr.mxu0 0.0
    %783 = vmatpush1.msra.mxu0 0.0
    %784 = vmatprep.subr.mxu0 0.0
    %785 = vmatpush1.msra.mxu0 0.0
    %786 = vmatprep.subr.mxu0 0.0
    %787 = vmatpush1.msra.mxu0 0.0
    %788 = vmatprep.subr.mxu0 0.0
    %789 = vmatpush1.msra.mxu0 0.0
    %790 = vmatprep.subr.mxu0 0.0
    %791 = vmatpush1.msra.mxu0 0.0
    %792 = vmatprep.subr.mxu0 0.0
    %793 = vmatpush1.msra.mxu0 0.0
    %794 = vmatprep.subr.mxu0 0.0
    %795 = vmatpush1.msra.mxu0 0.0
    %796 = vmatprep.subr.mxu0 0.0
    %797 = vmatpush1.msra.mxu0 0.0
    %798 = vmatprep.subr.mxu0 0.0
    %799 = vmatpush1.msra.mxu0 0.0
    %800 = vmatprep.subr.mxu0 0.0
    %801 = vmatpush1.msra.mxu0 0.0
    %802 = vmatprep.subr.mxu0 0.0
    %803 = vmatpush1.msra.mxu0 0.0
    %804 = vmatprep.subr.mxu0 0.0
    %805 = vmatpush1.msra.mxu0 0.0
    %806 = vmatprep.mubr.f32.mxu0 0.0
    %807 = vmatmul.mubr.f32.gmra.mrb[0].mxu0 %v119
    %v808 = vpop.f32.mrb[0].mxu0
    %v809 = vadd.f32 0.0, %v808
    %v810 = vpop.f32.mrb[0].mxu0
    %811 = vmatprep.mubr.f32.mxu0 0.0
    %812 = vmatmul.mubr.f32.gmra.mrb[0].mxu0 %v122
    %v813 = vpop.f32.mrb[0].mxu0
    %v814 = vadd.f32 0.0, %v813
    %v815 = vpop.f32.mrb[0].mxu0
    %816 = vmatprep.mubr.f32.mxu0 0.0
    %817 = vmatmul.mubr.f32.gmra.mrb[0].mxu0 %v125
    %v818 = vpop.f32.mrb[0].mxu0
    %v819 = vadd.f32 0.0, %v818
    %v820 = vpop.f32.mrb[0].mxu0
    %821 = vmatprep.mubr.f32.mxu0 0.0
    %822 = vmatmul.mubr.f32.gmra.mrb[0].mxu0 %v128
    %v823 = vpop.f32.mrb[0].mxu0
    %v824 = vadd.f32 0.0, %v823
    %v825 = vpop.f32.mrb[0].mxu0
    %826 = vdwg.mxu0
    %v827 = vadd.f32 %v809, %v535
    %v828 = vadd.f32 %v814, %v536
    %v829 = vadd.f32 %v819, %v537
    %v830 = vadd.f32 %v824, %v538
    %v831 = vsub.f32 %v827, %v97
    %v832 = vsub.f32 %v828, %v98
    %v833 = vsub.f32 %v829, %v99
    %v834 = vsub.f32 %v830, %v100
    %v835 = vstv %s578
    %v836 = vmul.f32 %v835, %v831
    %v837 = vmul.f32 %v835, %v832
    %v838 = vmul.f32 %v835, %v833
    %v839 = vmul.f32 %v835, %v834
    %v840 = vadd.f32 %v552, %v836
    %v841 = vadd.f32 %v553, %v837
    %v842 = vadd.f32 %v554, %v838
    %v843 = vadd.f32 %v555, %v839
    %v844 = vstv %s581
    %v845 = vmul.f32 %v844, %v840
    %v846 = vmul.f32 %v844, %v841
    %v847 = vmul.f32 %v844, %v842
    %v848 = vmul.f32 %v844, %v843
    %v849 = vsub.f32 %v535, %v845
    %v850 = vsub.f32 %v536, %v846
    %v851 = vsub.f32 %v537, %v847
    %v852 = vsub.f32 %v538, %v848
    %s853 = ssub.f32 0.0, %s583
    %v854 = vstv %s853
    %v855 = vmax.f32 %v854, %v849
    %v856 = vmax.f32 %v854, %v850
    %v857 = vmax.f32 %v854, %v851
    %v858 = vmax.f32 %v854, %v852
    %v859 = vstv %s583
    %v860 = vmin.f32 %v859, %v855
    %v861 = vmin.f32 %v859, %v856
    %v862 = vmin.f32 %v859, %v857
    %v863 = vmin.f32 %v859, %v858
    %v864 = vsub.f32 %v849, %v860
    %v865 = vsub.f32 %v850, %v861
    %v866 = vsub.f32 %v851, %v862
    %v867 = vsub.f32 %v852, %v863
    %v868 = vadd.f32 %v809, %v864
    %v869 = vadd.f32 %v814, %v865
    %v870 = vadd.f32 %v819, %v866
    %v871 = vadd.f32 %v824, %v867
    %v872 = vsub.f32 %v868, %v97
    %v873 = vsub.f32 %v869, %v98
    %v874 = vsub.f32 %v870, %v99
    %v875 = vsub.f32 %v871, %v100
    %v876 = vstv %s579
    %v877 = vmul.f32 %v876, %v872
    %v878 = vmul.f32 %v876, %v873
    %v879 = vmul.f32 %v876, %v874
    %v880 = vmul.f32 %v876, %v875
    %v881 = vadd.f32 %v552, %v877
    %v882 = vadd.f32 %v553, %v878
    %v883 = vadd.f32 %v554, %v879
    %v884 = vadd.f32 %v555, %v880
    %s885 = scalar_lea.vmem [#allocation15], 64
    %886 = vst [vmem:[%s885] sm:$0xff] %v734
    %887 = vst [vmem:[%s885 + $0x8] sm:$0xff] %v735
    %888 = vst [vmem:[%s885 + $0x10] sm:$0xff] %v736
    %889 = vst [vmem:[%s885 + $0x18] sm:$0xff] %v737
    %890 = vst [vmem:[%s885 + $0x20] sm:$0xff] %v738
    %891 = vst [vmem:[%s885 + $0x28] sm:$0xff] %v739
    %892 = vst [vmem:[%s885 + $0x30] sm:$0xff] %v740
    %893 = vst [vmem:[%s885 + $0x38] sm:$0xff] %v741
    %s894 = scalar_lea.vmem [#allocation16], 32
    %895 = vst [vmem:[%s894] sm:$0xff] %v864
    %896 = vst [vmem:[%s894 + $0x8] sm:$0xff] %v865
    %897 = vst [vmem:[%s894 + $0x10] sm:$0xff] %v866
    %898 = vst [vmem:[%s894 + $0x18] sm:$0xff] %v867
    %s899 = scalar_lea.vmem [#allocation18], 32
    %900 = vst [vmem:[%s899] sm:$0xff] %v881
    %901 = vst [vmem:[%s899 + $0x8] sm:$0xff] %v882
    %902 = vst [vmem:[%s899 + $0x10] sm:$0xff] %v883
    %903 = vst [vmem:[%s899 + $0x18] sm:$0xff] %v884
    %s904 = scalar_lea.vmem [#allocation19], 64
    %905 = vst [vmem:[%s904] sm:$0xff] %v872
    %906 = vst [vmem:[%s904 + $0x8] sm:$0xff] %v873
    %907 = vst [vmem:[%s904 + $0x10] sm:$0xff] %v874
    %908 = vst [vmem:[%s904 + $0x18] sm:$0xff] %v875
    %s909 = sld [smem:[#allocation3 + $0x2]]
    %s910 = sld [smem:[#allocation4 + $0x2]]
    %s911 = sld [smem:[#allocation5 + $0x2]]
    %s912 = sld [smem:[#allocation6 + $0x2]]
    %s913 = sld [smem:[#allocation7 + $0x2]]
    %s914 = sld [smem:[#allocation8 + $0x2]]
    %s915 = sld [smem:[#allocation9 + $0x2]]
    %v916 = vstv %s909
    %v917 = vmul.f32 %v916, %v872
    %v918 = vmul.f32 %v916, %v873
    %v919 = vmul.f32 %v916, %v874
    %v920 = vmul.f32 %v916, %v875
    %v921 = vadd.f32 %v881, %v917
    %v922 = vadd.f32 %v882, %v918
    %v923 = vadd.f32 %v883, %v919
    %v924 = vadd.f32 %v884, %v920
    %925 = vmatprep.subr.mxu0 0.0
    %926 = vmatpush1.msra.mxu0 %v921
    %927 = vmatprep.subr.mxu0 0.0
    %928 = vmatpush1.msra.mxu0 %v922
    %929 = vmatprep.subr.mxu0 0.0
    %930 = vmatpush1.msra.mxu0 %v923
    %931 = vmatprep.subr.mxu0 0.0
    %932 = vmatpush1.msra.mxu0 %v924
    %933 = vmatprep.subr.mxu0 0.0
    %934 = vmatpush1.msra.mxu0 0.0
    %935 = vmatprep.subr.mxu0 0.0
    %936 = vmatpush1.msra.mxu0 0.0
    %937 = vmatprep.subr.mxu0 0.0
    %938 = vmatpush1.msra.mxu0 0.0
    %939 = vmatprep.subr.mxu0 0.0
    %940 = vmatpush1.msra.mxu0 0.0
    %941 = vmatprep.subr.mxu0 0.0
    %942 = vmatpush1.msra.mxu0 0.0
    %943 = vmatprep.subr.mxu0 0.0
    %944 = vmatpush1.msra.mxu0 0.0
    %945 = vmatprep.subr.mxu0 0.0
    %946 = vmatpush1.msra.mxu0 0.0
    %947 = vmatprep.subr.mxu0 0.0
    %948 = vmatpush1.msra.mxu0 0.0
    %949 = vmatprep.subr.mxu0 0.0
    %950 = vmatpush1.msra.mxu0 0.0
    %951 = vmatprep.subr.mxu0 0.0
    %952 = vmatpush1.msra.mxu0 0.0
    %953 = vmatprep.subr.mxu0 0.0
    %954 = vmatpush1.msra.mxu0 0.0
    %955 = vmatprep.subr.mxu0 0.0
    %956 = vmatpush1.msra.mxu0 0.0
    %957 = vmatprep.subr.mxu0 0.0
    %958 = vmatpush1.msra.mxu0 0.0
    %959 = vmatprep.subr.mxu0 0.0
    %960 = vmatpush1.msra.mxu0 0.0
    %961 = vmatprep.subr.mxu0 0.0
    %962 = vmatpush1.msra.mxu0 0.0
    %963 = vmatprep.subr.mxu0 0.0
    %964 = vmatpush1.msra.mxu0 0.0
    %965 = vmatprep.subr.mxu0 0.0
    %966 = vmatpush1.msra.mxu0 0.0
    %967 = vmatprep.subr.mxu0 0.0
    %968 = vmatpush1.msra.mxu0 0.0
    %969 = vmatprep.subr.mxu0 0.0
    %970 = vmatpush1.msra.mxu0 0.0
    %971 = vmatprep.subr.mxu0 0.0
    %972 = vmatpush1.msra.mxu0 0.0
    %973 = vmatprep.subr.mxu0 0.0
    %974 = vmatpush1.msra.mxu0 0.0
    %975 = vmatprep.subr.mxu0 0.0
    %976 = vmatpush1.msra.mxu0 0.0
    %977 = vmatprep.subr.mxu0 0.0
    %978 = vmatpush1.msra.mxu0 0.0
    %979 = vmatprep.subr.mxu0 0.0
    %980 = vmatpush1.msra.mxu0 0.0
    %981 = vmatprep.subr.mxu0 0.0
    %982 = vmatpush1.msra.mxu0 0.0
    %983 = vmatprep.subr.mxu0 0.0
    %984 = vmatpush1.msra.mxu0 0.0
    %985 = vmatprep.subr.mxu0 0.0
    %986 = vmatpush1.msra.mxu0 0.0
    %987 = vmatprep.subr.mxu0 0.0
    %988 = vmatpush1.msra.mxu0 0.0
    %989 = vmatprep.mubr.f32.mxu0 0.0
    %990 = vmatmul.mubr.f32.gmra.mrb[0].mxu0 %v241
    %v991 = vpop.f32.mrb[0].mxu0
    %v992 = vadd.f32 0.0, %v991
    %v993 = vpop.f32.mrb[0].mxu0
    %994 = vmatprep.mubr.f32.mxu0 0.0
    %995 = vmatmul.mubr.f32.gmra.mrb[0].mxu0 %v244
    %v996 = vpop.f32.mrb[0].mxu0
    %v997 = vadd.f32 0.0, %v996
    %v998 = vpop.f32.mrb[0].mxu0
    %999 = vmatprep.mubr.f32.mxu0 0.0
    %1000 = vmatmul.mubr.f32.gmra.mrb[0].mxu0 %v247
    %v1001 = vpop.f32.mrb[0].mxu0
    %v1002 = vadd.f32 0.0, %v1001
    %v1003 = vpop.f32.mrb[0].mxu0
    %1004 = vmatprep.mubr.f32.mxu0 0.0
    %1005 = vmatmul.mubr.f32.gmra.mrb[0].mxu0 %v250
    %v1006 = vpop.f32.mrb[0].mxu0
    %v1007 = vadd.f32 0.0, %v1006
    %v1008 = vpop.f32.mrb[0].mxu0
    %1009 = vmatprep.mubr.f32.mxu0 0.0
    %1010 = vmatmul.mubr.f32.gmra.mrb[0].mxu0 %v253
    %v1011 = vpop.f32.mrb[0].mxu0
    %v1012 = vadd.f32 0.0, %v1011
    %v1013 = vpop.f32.mrb[0].mxu0
    %1014 = vmatprep.mubr.f32.mxu0 0.0
    %1015 = vmatmul.mubr.f32.gmra.mrb[0].mxu0 %v256
    %v1016 = vpop.f32.mrb[0].mxu0
    %v1017 = vadd.f32 0.0, %v1016
    %v1018 = vpop.f32.mrb[0].mxu0
    %1019 = vmatprep.mubr.f32.mxu0 0.0
    %1020 = vmatmul.mubr.f32.gmra.mrb[0].mxu0 %v259
    %v1021 = vpop.f32.mrb[0].mxu0
    %v1022 = vadd.f32 0.0, %v1021
    %v1023 = vpop.f32.mrb[0].mxu0
    %1024 = vmatprep.mubr.f32.mxu0 0.0
    %1025 = vmatmul.mubr.f32.gmra.mrb[0].mxu0 %v262
    %v1026 = vpop.f32.mrb[0].mxu0
    %v1027 = vadd.f32 0.0, %v1026
    %v1028 = vpop.f32.mrb[0].mxu0
    %1029 = vdwg.mxu0
    %v1030 = vstv %s912
    %v1031 = vmul.f32 %v1030, %v992
    %v1032 = vmul.f32 %v1030, %v997
    %v1033 = vmul.f32 %v1030, %v1002
    %v1034 = vmul.f32 %v1030, %v1007
    %v1035 = vmul.f32 %v1030, %v1012
    %v1036 = vmul.f32 %v1030, %v1017
    %v1037 = vmul.f32 %v1030, %v1022
    %v1038 = vmul.f32 %v1030, %v1027
    %v1039 = vsub.f32 %v734, %v1031
    %v1040 = vsub.f32 %v735, %v1032
    %v1041 = vsub.f32 %v736, %v1033
    %v1042 = vsub.f32 %v737, %v1034
    %v1043 = vsub.f32 %v738, %v1035
    %v1044 = vsub.f32 %v739, %v1036
    %v1045 = vsub.f32 %v740, %v1037
    %v1046 = vsub.f32 %v741, %v1038
    %s1047 = ssub.f32 0.0, %s914
    %v1048 = vstv %s1047
    %v1049 = vmax.f32 %v1048, %v1039
    %v1050 = vmax.f32 %v1048, %v1040
    %v1051 = vmax.f32 %v1048, %v1041
    %v1052 = vmax.f32 %v1048, %v1042
    %v1053 = vmax.f32 %v1048, %v1043
    %v1054 = vmax.f32 %v1048, %v1044
    %v1055 = vmax.f32 %v1048, %v1045
    %v1056 = vmax.f32 %v1048, %v1046
    %v1057 = vstv %s914
    %v1058 = vmin.f32 %v1057, %v1049
    %v1059 = vmin.f32 %v1057, %v1050
    %v1060 = vmin.f32 %v1057, %v1051
    %v1061 = vmin.f32 %v1057, %v1052
    %v1062 = vmin.f32 %v1057, %v1053
    %v1063 = vmin.f32 %v1057, %v1054
    %v1064 = vmin.f32 %v1057, %v1055
    %v1065 = vmin.f32 %v1057, %v1056
    %v1066 = vsub.f32 %v1039, %v1058
    %v1067 = vsub.f32 %v1040, %v1059
    %v1068 = vsub.f32 %v1041, %v1060
    %v1069 = vsub.f32 %v1042, %v1061
    %v1070 = vsub.f32 %v1043, %v1062
    %v1071 = vsub.f32 %v1044, %v1063
    %v1072 = vsub.f32 %v1045, %v1064
    %v1073 = vsub.f32 %v1046, %v1065
    %1074 = vmatprep.subr.mxu0 0.0
    %1075 = vmatpush1.msra.mxu0 %v1066
    %1076 = vmatprep.subr.mxu0 0.0
    %1077 = vmatpush1.msra.mxu0 %v1067
    %1078 = vmatprep.subr.mxu0 0.0
    %1079 = vmatpush1.msra.mxu0 %v1068
    %1080 = vmatprep.subr.mxu0 0.0
    %1081 = vmatpush1.msra.mxu0 %v1069
    %1082 = vmatprep.subr.mxu0 0.0
    %1083 = vmatpush1.msra.mxu0 %v1070
    %1084 = vmatprep.subr.mxu0 0.0
    %1085 = vmatpush1.msra.mxu0 %v1071
    %1086 = vmatprep.subr.mxu0 0.0
    %1087 = vmatpush1.msra.mxu0 %v1072
    %1088 = vmatprep.subr.mxu0 0.0
    %1089 = vmatpush1.msra.mxu0 %v1073
    %1090 = vmatprep.subr.mxu0 0.0
    %1091 = vmatpush1.msra.mxu0 0.0
    %1092 = vmatprep.subr.mxu0 0.0
    %1093 = vmatpush1.msra.mxu0 0.0
    %1094 = vmatprep.subr.mxu0 0.0
    %1095 = vmatpush1.msra.mxu0 0.0
    %1096 = vmatprep.subr.mxu0 0.0
    %1097 = vmatpush1.msra.mxu0 0.0
    %1098 = vmatprep.subr.mxu0 0.0
    %1099 = vmatpush1.msra.mxu0 0.0
    %1100 = vmatprep.subr.mxu0 0.0
    %1101 = vmatpush1.msra.mxu0 0.0
    %1102 = vmatprep.subr.mxu0 0.0
    %1103 = vmatpush1.msra.mxu0 0.0
    %1104 = vmatprep.subr.mxu0 0.0
    %1105 = vmatpush1.msra.mxu0 0.0
    %1106 = vmatprep.subr.mxu0 0.0
    %1107 = vmatpush1.msra.mxu0 0.0
    %1108 = vmatprep.subr.mxu0 0.0
    %1109 = vmatpush1.msra.mxu0 0.0
    %1110 = vmatprep.subr.mxu0 0.0
    %1111 = vmatpush1.msra.mxu0 0.0
    %1112 = vmatprep.subr.mxu0 0.0
    %1113 = vmatpush1.msra.mxu0 0.0
    %1114 = vmatprep.subr.mxu0 0.0
    %1115 = vmatpush1.msra.mxu0 0.0
    %1116 = vmatprep.subr.mxu0 0.0
    %1117 = vmatpush1.msra.mxu0 0.0
    %1118 = vmatprep.subr.mxu0 0.0
    %1119 = vmatpush1.msra.mxu0 0.0
    %1120 = vmatprep.subr.mxu0 0.0
    %1121 = vmatpush1.msra.mxu0 0.0
    %1122 = vmatprep.subr.mxu0 0.0
    %1123 = vmatpush1.msra.mxu0 0.0
    %1124 = vmatprep.subr.mxu0 0.0
    %1125 = vmatpush1.msra.mxu0 0.0
    %1126 = vmatprep.subr.mxu0 0.0
    %1127 = vmatpush1.msra.mxu0 0.0
    %1128 = vmatprep.subr.mxu0 0.0
    %1129 = vmatpush1.msra.mxu0 0.0
    %1130 = vmatprep.subr.mxu0 0.0
    %1131 = vmatpush1.msra.mxu0 0.0
    %1132 = vmatprep.subr.mxu0 0.0
    %1133 = vmatpush1.msra.mxu0 0.0
    %1134 = vmatprep.subr.mxu0 0.0
    %1135 = vmatpush1.msra.mxu0 0.0
    %1136 = vmatprep.subr.mxu0 0.0
    %1137 = vmatpush1.msra.mxu0 0.0
    %1138 = vmatprep.mubr.f32.mxu0 0.0
    %1139 = vmatmul.mubr.f32.gmra.mrb[0].mxu0 %v119
    %v1140 = vpop.f32.mrb[0].mxu0
    %v1141 = vadd.f32 0.0, %v1140
    %v1142 = vpop.f32.mrb[0].mxu0
    %1143 = vmatprep.mubr.f32.mxu0 0.0
    %1144 = vmatmul.mubr.f32.gmra.mrb[0].mxu0 %v122
    %v1145 = vpop.f32.mrb[0].mxu0
    %v1146 = vadd.f32 0.0, %v1145
    %v1147 = vpop.f32.mrb[0].mxu0
    %1148 = vmatprep.mubr.f32.mxu0 0.0
    %1149 = vmatmul.mubr.f32.gmra.mrb[0].mxu0 %v125
    %v1150 = vpop.f32.mrb[0].mxu0
    %v1151 = vadd.f32 0.0, %v1150
    %v1152 = vpop.f32.mrb[0].mxu0
    %1153 = vmatprep.mubr.f32.mxu0 0.0
    %1154 = vmatmul.mubr.f32.gmra.mrb[0].mxu0 %v128
    %v1155 = vpop.f32.mrb[0].mxu0
    %v1156 = vadd.f32 0.0, %v1155
    %v1157 = vpop.f32.mrb[0].mxu0
    %1158 = vdwg.mxu0
    %v1159 = vadd.f32 %v1141, %v864
    %v1160 = vadd.f32 %v1146, %v865
    %v1161 = vadd.f32 %v1151, %v866
    %v1162 = vadd.f32 %v1156, %v867
    %v1163 = vsub.f32 %v1159, %v97
    %v1164 = vsub.f32 %v1160, %v98
    %v1165 = vsub.f32 %v1161, %v99
    %v1166 = vsub.f32 %v1162, %v100
    %v1167 = vstv %s910
    %v1168 = vmul.f32 %v1167, %v1163
    %v1169 = vmul.f32 %v1167, %v1164
    %v1170 = vmul.f32 %v1167, %v1165
    %v1171 = vmul.f32 %v1167, %v1166
    %v1172 = vadd.f32 %v881, %v1168
    %v1173 = vadd.f32 %v882, %v1169
    %v1174 = vadd.f32 %v883, %v1170
    %v1175 = vadd.f32 %v884, %v1171
    %v1176 = vstv %s913
    %v1177 = vmul.f32 %v1176, %v1172
    %v1178 = vmul.f32 %v1176, %v1173
    %v1179 = vmul.f32 %v1176, %v1174
    %v1180 = vmul.f32 %v1176, %v1175
    %v1181 = vsub.f32 %v864, %v1177
    %v1182 = vsub.f32 %v865, %v1178
    %v1183 = vsub.f32 %v866, %v1179
    %v1184 = vsub.f32 %v867, %v1180
    %s1185 = ssub.f32 0.0, %s915
    %v1186 = vstv %s1185
    %v1187 = vmax.f32 %v1186, %v1181
    %v1188 = vmax.f32 %v1186, %v1182
    %v1189 = vmax.f32 %v1186, %v1183
    %v1190 = vmax.f32 %v1186, %v1184
    %v1191 = vstv %s915
    %v1192 = vmin.f32 %v1191, %v1187
    %v1193 = vmin.f32 %v1191, %v1188
    %v1194 = vmin.f32 %v1191, %v1189
    %v1195 = vmin.f32 %v1191, %v1190
    %v1196 = vsub.f32 %v1181, %v1192
    %v1197 = vsub.f32 %v1182, %v1193
    %v1198 = vsub.f32 %v1183, %v1194
    %v1199 = vsub.f32 %v1184, %v1195
    %v1200 = vadd.f32 %v1141, %v1196
    %v1201 = vadd.f32 %v1146, %v1197
    %v1202 = vadd.f32 %v1151, %v1198
    %v1203 = vadd.f32 %v1156, %v1199
    %v1204 = vsub.f32 %v1200, %v97
    %v1205 = vsub.f32 %v1201, %v98
    %v1206 = vsub.f32 %v1202, %v99
    %v1207 = vsub.f32 %v1203, %v100
    %v1208 = vstv %s911
    %v1209 = vmul.f32 %v1208, %v1204
    %v1210 = vmul.f32 %v1208, %v1205
    %v1211 = vmul.f32 %v1208, %v1206
    %v1212 = vmul.f32 %v1208, %v1207
    %v1213 = vadd.f32 %v881, %v1209
    %v1214 = vadd.f32 %v882, %v1210
    %v1215 = vadd.f32 %v883, %v1211
    %v1216 = vadd.f32 %v884, %v1212
    %s1217 = scalar_lea.vmem [#allocation15], 128
    %1218 = vst [vmem:[%s1217] sm:$0xff] %v1066
    %1219 = vst [vmem:[%s1217 + $0x8] sm:$0xff] %v1067
    %1220 = vst [vmem:[%s1217 + $0x10] sm:$0xff] %v1068
    %1221 = vst [vmem:[%s1217 + $0x18] sm:$0xff] %v1069
    %1222 = vst [vmem:[%s1217 + $0x20] sm:$0xff] %v1070
    %1223 = vst [vmem:[%s1217 + $0x28] sm:$0xff] %v1071
    %1224 = vst [vmem:[%s1217 + $0x30] sm:$0xff] %v1072
    %1225 = vst [vmem:[%s1217 + $0x38] sm:$0xff] %v1073
    %s1226 = scalar_lea.vmem [#allocation16], 64
    %1227 = vst [vmem:[%s1226] sm:$0xff] %v1196
    %1228 = vst [vmem:[%s1226 + $0x8] sm:$0xff] %v1197
    %1229 = vst [vmem:[%s1226 + $0x10] sm:$0xff] %v1198
    %1230 = vst [vmem:[%s1226 + $0x18] sm:$0xff] %v1199
    %s1231 = scalar_lea.vmem [#allocation18], 64
    %1232 = vst [vmem:[%s1231] sm:$0xff] %v1213
    %1233 = vst [vmem:[%s1231 + $0x8] sm:$0xff] %v1214
    %1234 = vst [vmem:[%s1231 + $0x10] sm:$0xff] %v1215
    %1235 = vst [vmem:[%s1231 + $0x18] sm:$0xff] %v1216
    %s1236 = scalar_lea.vmem [#allocation19], 96
    %1237 = vst [vmem:[%s1236] sm:$0xff] %v1204
    %1238 = vst [vmem:[%s1236 + $0x8] sm:$0xff] %v1205
    %1239 = vst [vmem:[%s1236 + $0x10] sm:$0xff] %v1206
    %1240 = vst [vmem:[%s1236 + $0x18] sm:$0xff] %v1207
    // Predicated region
    $region34: #{tpu_custom_call.1} parent=1 // pred_check
      _
    $region35: #{tpu_custom_call.1} parent=1 // pred_check_branch
      %1242 = sbr.rel (0) target = $region37
    $region36: #{tpu_custom_call.1} parent=1 // pred_region
      %s1244 = ssub.s32 3072, 3072
      %1245 = vsyncadd [#allocation12], %s1244
      %s1246 = sshll.u32 [#allocation15], 4
      %s1247 = int_to_ptr.vmem [resolvable:$true] %s1246
      %1252 = dma.vmem_to_hbm [thread:$0]  %s1247, 3072, %s13, [#allocation12], 128, 128, 8
    $region37: #{tpu_custom_call.1} parent=1 // pred_fallthru
      _
    // Predicated region
    $region38: #{tpu_custom_call.1} parent=1 // pred_check
      _
    $region39: #{tpu_custom_call.1} parent=1 // pred_check_branch
      %1254 = sbr.rel (0) target = $region41
    $region40: #{tpu_custom_call.1} parent=1 // pred_region
      %s1256 = ssub.s32 1536, 1536
      %1257 = vsyncadd [#allocation17], %s1256
      %s1258 = sshll.u32 [#allocation16], 4
      %s1259 = int_to_ptr.vmem [resolvable:$true] %s1258
      %1264 = dma.vmem_to_hbm [thread:$0]  %s1259, 1536, %s14, [#allocation17], 128, 128, 8
    $region41: #{tpu_custom_call.1} parent=1 // pred_fallthru
      _
    // Predicated region
    $region42: #{tpu_custom_call.1} parent=1 // pred_check
      _
    $region43: #{tpu_custom_call.1} parent=1 // pred_check_branch
      %1266 = sbr.rel (0) target = $region45
    $region44: #{tpu_custom_call.1} parent=1 // pred_region
      %s1268 = ssub.s32 1536, 1536
      %1269 = vsyncadd [#allocation17], %s1268
      %s1270 = sshll.u32 [#allocation18], 4
      %s1271 = int_to_ptr.vmem [resolvable:$true] %s1270
      %1276 = dma.vmem_to_hbm [thread:$0]  %s1271, 1536, %s15, [#allocation17], 128, 128, 8
    $region45: #{tpu_custom_call.1} parent=1 // pred_fallthru
      _
    // Predicated region
    $region46: #{tpu_custom_call.1} parent=1 // pred_check
      _
    $region47: #{tpu_custom_call.1} parent=1 // pred_check_branch
      %1278 = sbr.rel (0) target = $region49
    $region48: #{tpu_custom_call.1} parent=1 // pred_region
      %s1280 = ssub.s32 2048, 2048
      %1281 = vsyncadd [#allocation20], %s1280
      %s1282 = sshll.u32 [#allocation19], 4
      %s1283 = int_to_ptr.vmem [resolvable:$true] %s1282
      %1288 = dma.vmem_to_hbm [thread:$0]  %s1283, 2048, %s16, [#allocation20], 128, 128, 8
    $region49: #{tpu_custom_call.1} parent=1 // pred_fallthru
      _
    // Predicated region
    $region50: #{tpu_custom_call.1} parent=1 // pred_check
      _
    $region51: #{tpu_custom_call.1} parent=1 // pred_check_branch
      %1290 = sbr.rel (0) target = $region53
    $region52: #{tpu_custom_call.1} parent=1 // pred_region
      %1291 = dma.done [#allocation12], 3072
    $region53: #{tpu_custom_call.1} parent=1 // pred_fallthru
      _
    // Predicated region
    $region54: #{tpu_custom_call.1} parent=1 // pred_check
      _
    $region55: #{tpu_custom_call.1} parent=1 // pred_check_branch
      %1293 = sbr.rel (0) target = $region57
    $region56: #{tpu_custom_call.1} parent=1 // pred_region
      %1294 = dma.done [#allocation17], 1536
    $region57: #{tpu_custom_call.1} parent=1 // pred_fallthru
      _
    // Predicated region
    $region58: #{tpu_custom_call.1} parent=1 // pred_check
      _
    $region59: #{tpu_custom_call.1} parent=1 // pred_check_branch
      %1296 = sbr.rel (0) target = $region61
    $region60: #{tpu_custom_call.1} parent=1 // pred_region
      %1297 = dma.done [#allocation17], 1536
    $region61: #{tpu_custom_call.1} parent=1 // pred_fallthru
      _
    // Predicated region
    $region62: #{tpu_custom_call.1} parent=1 // pred_check
      _
    $region63: #{tpu_custom_call.1} parent=1 // pred_check_branch
      %1299 = sbr.rel (0) target = $region65
    $region64: #{tpu_custom_call.1} parent=1 // pred_region
      %1300 = dma.done [#allocation20], 2048
    $region65: #{tpu_custom_call.1} parent=1 // pred_fallthru
      _
    %1301 = vsyncpa [#allocation11], 1
    %1302 = vsyncpa [#allocation14], 1
    %1303 = vsyncpa [#allocation12], 1
    %1304 = vsyncpa [#allocation17], 1
    %1305 = vsyncpa [#allocation20], 1

</llo_original>
